<compile_context>
chip_gen: v6e
topology: v6e:2x2x1
jax: 0.10.0
libtpu: 0.0.40
codegen_flags: <defaults>
</compile_context>

<pallas_src>
import functools

import jax
import jax.numpy as jnp
from jax.experimental import pallas as pl
from jax.experimental.pallas import tpu as pltpu


def _round_up(a, b):
    return ((a + b - 1) // b) * b


def _vmem_limit_bytes():
    """Scoped-VMEM limit with headroom under physical capacity.

    v5e/v6e (128 MiB physical) -> 96 MiB; v7x (64 MiB/TC physical) -> 48 MiB.
    """
    cap = 128 * 1024 * 1024
    try:
        cap = int(pltpu.get_tpu_info().vmem_capacity_bytes)
    except Exception:
        pass
    return max(32 * 1024 * 1024, min(cap * 3 // 4, 96 * 1024 * 1024))


def _choose_f_tile(d_ffn):
    """Largest lane-friendly d_ffn tile (multiple of 128) dividing d_ffn."""
    for cand in (1024, 512, 256, 128):
        if d_ffn % cand == 0:
            return cand
    return d_ffn


def _choose_expert_tm(n_tokens, d_model, f_tile, xn_bytes, out_bytes, w_bytes,
                      mult, budget):
    """Row tile for the expert kernel.

    The budget charges the double-buffered streamed weight tile, the f32
    accumulator scratch and the (tm, f_tile) h1/h3/h temporaries (the terms
    the v7x review flagged as missing before).
    """
    tm = min(256, _round_up(max(n_tokens, mult), mult))
    tm = _round_up(tm, mult)
    w_tile = 3 * d_model * f_tile * w_bytes + 2 * f_tile * 4 + d_model * 4

    def need(t):
        streams = 2 * (t * d_model * (xn_bytes + out_bytes) + 2 * t * 2 * 4)
        weights = 2 * w_tile                       # double-buffered expert tile
        scratch = t * d_model * 4                  # f32 accumulator
        temps = 3 * t * f_tile * 4 + 2 * t * d_model * 4
        return streams + weights + scratch + temps

    while tm > mult and need(tm) > budget:
        tm = max(mult, _round_up(tm // 2, mult))
    return tm


def _choose_router_tm(n_tokens, d_model, num_experts, x_bytes, xn_bytes,
                      mult, budget, tm_expert):
    """Independent (larger) row tile for the router kernel.

    It holds no expert weights, so bigger tiles (fewer grid steps, closer to
    the HBM roofline) are cheap.  Kept a multiple of the expert tile so both
    kernels share one padded token count.
    """
    tm = min(1024, _round_up(max(n_tokens, mult), mult))
    tm = _round_up(tm, mult)

    def need(t):
        streams = 2 * (t * d_model * (x_bytes + xn_bytes) + 2 * t * 2 * 4)
        temps = 4 * t * d_model * 4 + 4 * t * num_experts * 4
        weights = 2 * d_model * num_experts * 4
        return streams + temps + weights

    while tm > mult and need(tm) > budget:
        tm = max(mult, _round_up(tm // 2, mult))
    if tm <= tm_expert:
        return tm_expert
    return (tm // tm_expert) * tm_expert


# --------------------------------------------------------------------------
# Kernel 1: fused RMSNorm + router linear + softmax + top-k + psum partials
# --------------------------------------------------------------------------
def _rms_router_kernel(x_ref, wt_ref, b_ref, g_ref,
                       xn_ref, wts_ref, idx_ref, psum_ref, *, n_valid, eps):
    tm = x_ref.shape[0]
    top_k = wts_ref.shape[1]
    num_experts = wt_ref.shape[1]

    x = x_ref[...].astype(jnp.float32)                       # (tm, D)

    # RMSNorm (fused prologue); stored once (lane-dense, bf16) for kernel 2.
    ms = jnp.mean(x * x, axis=-1, keepdims=True)
    xn = x * jax.lax.rsqrt(ms + eps) * g_ref[...]            # (tm, D) f32
    xn_ref[...] = xn.astype(xn_ref.dtype)

    # Router linear in f32 (negligible FLOPs; keeps top-k selection stable).
    logits = jnp.dot(xn, wt_ref[...],
                     preferred_element_type=jnp.float32) + b_ref[...]

    # Softmax over experts.
    m = jnp.max(logits, axis=-1, keepdims=True)
    ex = jnp.exp(logits - m)
    probs = ex / jnp.sum(ex, axis=-1, keepdims=True)

    # Per-tile partial expert-probability sums (no cross-step accumulator, so
    # the grid axis stays "parallel").  Padded rows are masked out.
    row = pl.program_id(0) * tm + jax.lax.broadcasted_iota(jnp.int32, (tm, 1), 0)
    valid = row < n_valid
    psum = jnp.sum(jnp.where(valid, probs, 0.0), axis=0, keepdims=True)  # (1, E)
    psum_ref[...] = psum.reshape(psum_ref.shape)                         # (1, 1, E)

    # Iterative top-k (unrolled; top_k is small & static).
    lane_ids = jax.lax.broadcasted_iota(jnp.int32, probs.shape, 1)
    p = probs
    vals, idxs = [], []
    for _ in range(top_k):
        v = jnp.max(p, axis=-1, keepdims=True)
        i = jnp.min(jnp.where(p == v, lane_ids, num_experts),
                    axis=-1, keepdims=True)
        vals.append(v)
        idxs.append(i)
        p = jnp.where(lane_ids == i, -1.0, p)                # mask selected expert

    top_v = jnp.concatenate(vals, axis=-1)                   # (tm, K)
    top_i = jnp.concatenate(idxs, axis=-1)                   # (tm, K)
    wts_ref[...] = top_v / jnp.sum(top_v, axis=-1, keepdims=True)
    idx_ref[...] = top_i.astype(jnp.int32)


# --------------------------------------------------------------------------
# Kernel 2: streamed-expert SwiGLU + gated combine
#   grid = (token tiles [parallel], experts [arbitrary], d_ffn tiles [arbitrary])
#   out[t] = sum_e gate_e[t] * SwiGLU_e(x_norm[t]);  gate_e = top-k weight or 0
# --------------------------------------------------------------------------
def _expert_kernel(xn_ref, wts_ref, idx_ref,
                   w1_ref, b1_ref, w3_ref, b3_ref, w2_ref, b2_ref,
                   out_ref, acc_ref):
    e = pl.program_id(1)
    f = pl.program_id(2)
    last_e = pl.num_programs(1) - 1
    last_f = pl.num_programs(2) - 1

    @pl.when((e == 0) & (f == 0))
    def _():
        acc_ref[...] = jnp.zeros_like(acc_ref)

    # Gate for this expert (0 for tokens that did not route here).
    gate = jnp.sum(jnp.where(idx_ref[...] == e, wts_ref[...], 0.0),
                   axis=-1, keepdims=True)                    # (tm, 1) f32

    # Top-k sparsity: skip the MXU work when no token in this tile picked `e`.
    @pl.when(jnp.max(gate) > 0.0)
    def _():
        x = xn_ref[...]                                       # bf16 (MXU-native)
        h1 = jnp.dot(x, w1_ref[0],
                     preferred_element_type=jnp.float32) + b1_ref[0]
        h3 = jnp.dot(x, w3_ref[0],
                     preferred_element_type=jnp.float32) + b3_ref[0]
        h = h1 * (1.0 / (1.0 + jnp.exp(-h1))) * h3            # SiLU(h1) * h3
        o = jnp.dot(h.astype(w2_ref.dtype), w2_ref[0],
                    preferred_element_type=jnp.float32)
        # b2 is per-expert (not per-f_tile): add it exactly once, on f == 0.
        o = o + jnp.where(f == 0, 1.0, 0.0) * b2_ref[0]
        acc_ref[...] += gate * o

    @pl.when((e == last_e) & (f == last_f))
    def _():
        out_ref[...] = acc_ref[...].astype(out_ref.dtype)


# --------------------------------------------------------------------------
# Wrapper: full MoELayer.forward
# --------------------------------------------------------------------------
def moe_forward(x, padding_mask, params, *, top_k, eps=1e-7, training=True,
                use_aux_loss=True, use_bf16=True):
    """Returns (out [B,T,D], aux_loss, expert_weights [B,T,K], expert_indices [B,T,K]).

    `padding_mask` is accepted for API parity with the PyTorch module but is
    unused (the module ignores it too).
    """
    del padding_mask
    B, T, D = x.shape
    rw = params["router_w"]                 # (E, D)   nn.Linear weight
    rb = params["router_b"]                 # (E,)
    g = params["rms_weight"]                # (D,)
    w1, b1 = params["w1"], params["b1"]     # (E, F, D), (E, F)
    w3, b3 = params["w3"], params["b3"]     # (E, F, D), (E, F)
    w2, b2 = params["w2"], params["b2"]     # (E, D, F), (E, D)
    E = rw.shape[0]
    F = w1.shape[1]
    N = B * T

    # Expert weights & activations go through the MXU in bf16 (matching the
    # module's autocast intent) with f32 accumulation; the router stays f32.
    w_dtype = jnp.bfloat16 if use_bf16 else jnp.float32
    xn_dtype = jnp.bfloat16 if use_bf16 else jnp.float32
    out_dtype = x.dtype

    x_bytes = jnp.dtype(x.dtype).itemsize
    xn_bytes = jnp.dtype(xn_dtype).itemsize
    out_bytes = jnp.dtype(out_dtype).itemsize
    w_bytes = jnp.dtype(w_dtype).itemsize

    vmem_limit = _vmem_limit_bytes()
    budget = (vmem_limit * 17) // 20               # ~85% of the scoped limit
    mult = 16 if min(x_bytes, xn_bytes) < 4 else 8
    f_tile = _choose_f_tile(F)
    tm_e = _choose_expert_tm(N, D, f_tile, xn_bytes, out_bytes, w_bytes, mult, budget)
    tm_r = _choose_router_tm(N, D, E, x_bytes, xn_bytes, mult, budget, tm_e)

    n_pad = _round_up(max(N, tm_r), tm_r)
    nt_r = n_pad // tm_r
    nt_e = n_pad // tm_e
    nf = F // f_tile

    x_flat = x.reshape(N, D)
    if n_pad != N:
        x_flat = jnp.concatenate(
            [x_flat, jnp.zeros((n_pad - N, D), x_flat.dtype)], axis=0)

    # Layout plumbing in the wrapper (outside the hot loop): pre-transpose to
    # MXU rhs layouts; cast the (large) expert weights to bf16 once.
    router_wt = rw.T.astype(jnp.float32)                 # (D, E)
    router_b2d = rb.reshape(1, E).astype(jnp.float32)
    g2d = g.reshape(1, D).astype(jnp.float32)
    w1t = jnp.transpose(w1, (0, 2, 1)).astype(w_dtype)   # (E, D, F)
    w3t = jnp.transpose(w3, (0, 2, 1)).astype(w_dtype)   # (E, D, F)
    w2t = jnp.transpose(w2, (0, 2, 1)).astype(w_dtype)   # (E, F, D)
    b1r = b1.reshape(E, 1, F).astype(jnp.float32)
    b3r = b3.reshape(E, 1, F).astype(jnp.float32)
    b2r = b2.reshape(E, 1, D).astype(jnp.float32)

    # ---- kernel 1: RMSNorm + router ----
    kernel1 = functools.partial(_rms_router_kernel, n_valid=N, eps=eps)
    router_cost = pl.CostEstimate(
        flops=2 * n_pad * D * E + 6 * n_pad * D,
        transcendentals=n_pad * E,
        bytes_accessed=(n_pad * D * (x_bytes + xn_bytes) + n_pad * top_k * 8
                        + nt_r * E * 4 + D * E * 4),
    )
    xn, wts, idx, psum = pl.pallas_call(
        kernel1,
        out_shape=(
            jax.ShapeDtypeStruct((n_pad, D), xn_dtype),            # x_norm (bf16)
            jax.ShapeDtypeStruct((n_pad, top_k), jnp.float32),     # top-k weights
            jax.ShapeDtypeStruct((n_pad, top_k), jnp.int32),       # top-k indices
            jax.ShapeDtypeStruct((nt_r, 1, E), jnp.float32),       # psum partials
        ),
        grid_spec=pltpu.PrefetchScalarGridSpec(
            num_scalar_prefetch=0,
            grid=(nt_r,),
            in_specs=[
                pl.BlockSpec((tm_r, D), lambda i: (i, 0)),         # x tile
                pl.BlockSpec((D, E), lambda i: (0, 0)),            # router weight
                pl.BlockSpec((1, E), lambda i: (0, 0)),            # router bias
                pl.BlockSpec((1, D), lambda i: (0, 0)),            # RMSNorm gain
            ],
            out_specs=[
                pl.BlockSpec((tm_r, D), lambda i: (i, 0)),
                pl.BlockSpec((tm_r, top_k), lambda i: (i, 0)),
                pl.BlockSpec((tm_r, top_k), lambda i: (i, 0)),
                pl.BlockSpec((1, 1, E), lambda i: (i, 0, 0)),      # per-tile partial
            ],
        ),
        compiler_params=pltpu.CompilerParams(
            dimension_semantics=("parallel",),
            vmem_limit_bytes=vmem_limit,
        ),
        cost_estimate=router_cost,
    )(x_flat, router_wt, router_b2d, g2d)

    # ---- kernel 2: streamed SwiGLU experts + gated combine ----
    expert_cost = pl.CostEstimate(
        flops=6 * n_pad * E * D * F,
        transcendentals=n_pad * E * F,
        bytes_accessed=(n_pad * D * (xn_bytes + out_bytes) + n_pad * top_k * 8
                        + nt_e * 3 * E * D * F * w_bytes),
    )
    out = pl.pallas_call(
        _expert_kernel,
        out_shape=jax.ShapeDtypeStruct((n_pad, D), out_dtype),
        grid_spec=pltpu.PrefetchScalarGridSpec(
            num_scalar_prefetch=0,
            grid=(nt_e, E, nf),
            in_specs=[
                pl.BlockSpec((tm_e, D), lambda i, e, f: (i, 0)),
                pl.BlockSpec((tm_e, top_k), lambda i, e, f: (i, 0)),
                pl.BlockSpec((tm_e, top_k), lambda i, e, f: (i, 0)),
                pl.BlockSpec((1, D, f_tile), lambda i, e, f: (e, 0, f)),   # w1 tile
                pl.BlockSpec((1, 1, f_tile), lambda i, e, f: (e, 0, f)),   # b1 tile
                pl.BlockSpec((1, D, f_tile), lambda i, e, f: (e, 0, f)),   # w3 tile
                pl.BlockSpec((1, 1, f_tile), lambda i, e, f: (e, 0, f)),   # b3 tile
                pl.BlockSpec((1, f_tile, D), lambda i, e, f: (e, f, 0)),   # w2 tile
                pl.BlockSpec((1, 1, D), lambda i, e, f: (e, 0, 0)),        # b2
            ],
            out_specs=pl.BlockSpec((tm_e, D), lambda i, e, f: (i, 0)),
            scratch_shapes=[pltpu.VMEM((tm_e, D), jnp.float32)],           # f32 acc
        ),
        compiler_params=pltpu.CompilerParams(
            dimension_semantics=("parallel", "arbitrary", "arbitrary"),
            vmem_limit_bytes=vmem_limit,
        ),
        cost_estimate=expert_cost,
    )(xn, wts, idx, w1t, b1r, w3t, b3r, w2t, b2r)

    out = out[:N].reshape(B, T, D)
    expert_weights = wts[:N].reshape(B, T, top_k)
    expert_indices = idx[:N].reshape(B, T, top_k)

    aux_loss = jnp.float32(0.0)
    if use_aux_loss and training:
        experts_mass = jnp.sum(psum.reshape(nt_r, E), axis=0)     # (E,)
        fractions = experts_mass / jnp.sum(experts_mass)
        mean = jnp.mean(fractions)
        std = jnp.sqrt(jnp.sum((fractions - mean) ** 2) / (E - 1))  # torch.std (ddof=1)
        aux_loss = std / mean

    return out, aux_loss, expert_weights, expert_indices


# --------------------------------------------------------------------------
# Pure-JAX reference (mirrors the PyTorch MoELayer forward).
# expert_dtype=None -> full f32 math; expert_dtype=bf16 -> autocast-matched
# reference (same numerics as the kernel's bf16 expert matmuls).
# --------------------------------------------------------------------------
def _reference(x, params, top_k, eps=1e-7, expert_dtype=None):
    B, T, D = x.shape
    E = params["router_w"].shape[0]
    xf32 = x.astype(jnp.float32)
    rms = jnp.sqrt(jnp.mean(xf32 ** 2, axis=-1, keepdims=True) + eps)
    xn = params["rms_weight"] * (xf32 / rms)
    xf = xn.reshape(-1, D)
    logits = jnp.dot(xf, params["router_w"].T,
                     precision=jax.lax.Precision.HIGHEST) + params["router_b"]
    probs = jax.nn.softmax(logits, axis=-1)
    top_v, top_i = jax.lax.top_k(probs, top_k)
    top_w = top_v / jnp.sum(top_v, axis=-1, keepdims=True)

    xe = xf if expert_dtype is None else xf.astype(expert_dtype)
    out = jnp.zeros_like(xf)
    for e in range(E):
        w1 = params["w1"][e].T
        w3 = params["w3"][e].T
        w2 = params["w2"][e].T
        if expert_dtype is not None:
            w1 = w1.astype(expert_dtype)
            w3 = w3.astype(expert_dtype)
            w2 = w2.astype(expert_dtype)
        gate = jnp.sum(jnp.where(top_i == e, top_w, 0.0), axis=-1, keepdims=True)
        h1 = jnp.dot(xe, w1, preferred_element_type=jnp.float32) + params["b1"][e]
        h3 = jnp.dot(xe, w3, preferred_element_type=jnp.float32) + params["b3"][e]
        h = h1 * (1.0 / (1.0 + jnp.exp(-h1))) * h3
        hc = h if expert_dtype is None else h.astype(expert_dtype)
        o = jnp.dot(hc, w2, preferred_element_type=jnp.float32) + params["b2"][e]
        out = out + gate * o

    experts = probs.sum(axis=0)
    frac = experts / experts.sum()
    mean = jnp.mean(frac)
    std = jnp.sqrt(jnp.sum((frac - mean) ** 2) / (E - 1))
    aux = std / mean
    return (out.reshape(B, T, D), aux,
            top_w.reshape(B, T, top_k),
            top_i.astype(jnp.int32).reshape(B, T, top_k))


if __name__ == "__main__":
    # Small shapes consistent with the module: [B, T, d_model], d_ffn, E, K.
    B, T, D_MODEL, D_FFN = 2, 8, 32, 64
    NUM_EXPERTS, TOP_K = 8, 2

    key = jax.random.PRNGKey(0)
    ks = jax.random.split(key, 10)

    x = jax.random.normal(ks[0], (B, T, D_MODEL), dtype=jnp.float32)
    padding_mask = jnp.ones((B, T), dtype=jnp.float32)   # unused (matches module)

    params = dict(
        rms_weight=1.0 + 0.1 * jax.random.normal(ks[9], (D_MODEL,), dtype=jnp.float32),
        router_w=jax.random.normal(ks[1], (NUM_EXPERTS, D_MODEL), dtype=jnp.float32)
        / jnp.sqrt(D_MODEL),
        router_b=0.01 * jax.random.normal(ks[2], (NUM_EXPERTS,), dtype=jnp.float32),
        w1=jax.random.normal(ks[3], (NUM_EXPERTS, D_FFN, D_MODEL), dtype=jnp.float32)
        / jnp.sqrt(D_MODEL),
        b1=0.01 * jax.random.normal(ks[4], (NUM_EXPERTS, D_FFN), dtype=jnp.float32),
        w3=jax.random.normal(ks[5], (NUM_EXPERTS, D_FFN, D_MODEL), dtype=jnp.float32)
        / jnp.sqrt(D_MODEL),
        b3=0.01 * jax.random.normal(ks[6], (NUM_EXPERTS, D_FFN), dtype=jnp.float32),
        w2=jax.random.normal(ks[7], (NUM_EXPERTS, D_MODEL, D_FFN), dtype=jnp.float32)
        / jnp.sqrt(D_FFN),
        b2=0.01 * jax.random.normal(ks[8], (NUM_EXPERTS, D_MODEL), dtype=jnp.float32),
    )

    fwd = jax.jit(functools.partial(moe_forward, top_k=TOP_K,
                                    training=True, use_aux_loss=True,
                                    use_bf16=True))
    out, aux, ew, ei = fwd(x, padding_mask, params)
    jax.block_until_ready((out, aux, ew, ei))

    out_ref, aux_ref, ew_ref, ei_ref = _reference(x, params, TOP_K)
    out_ref_bf16, _, _, _ = _reference(x, params, TOP_K, expert_dtype=jnp.bfloat16)

    assert out.shape == (B, T, D_MODEL)
    assert ew.shape == (B, T, TOP_K) and ei.shape == (B, T, TOP_K)
    # Router path is f32 in the kernel: indices/weights/aux match the f32 ref.
    assert jnp.array_equal(ei, ei_ref), "expert indices mismatch"
    assert jnp.allclose(ew, ew_ref, atol=1e-4, rtol=1e-3), "gating weights mismatch"
    assert jnp.allclose(aux, aux_ref, atol=1e-4, rtol=1e-4), "aux loss mismatch"
    # Expert path runs bf16 matmuls with f32 accumulation (autocast-style):
    # tight check vs the bf16-matched reference, loose relative-norm check vs
    # the pure-f32 reference.
    assert jnp.allclose(out, out_ref_bf16, atol=1e-2, rtol=1e-2), \
        "MoE output mismatch (bf16-matched reference)"
    rel = jnp.linalg.norm(out - out_ref) / jnp.linalg.norm(out_ref)
    assert rel < 0.05, f"MoE output rel error vs f32 reference too high: {rel}"

    print("KERNEL_OK")
</pallas_src>

<mosaic_0001>
module attributes {stable_mosaic.version = 11 : i64} {
  func.func @_rms_router_kernel(%arg0: i32, %arg1: memref<16x32xf32, #tpu.memory_space<vmem>>, %arg2: memref<32x8xf32, #tpu.memory_space<vmem>>, %arg3: memref<1x8xf32, #tpu.memory_space<vmem>>, %arg4: memref<1x32xf32, #tpu.memory_space<vmem>>, %arg5: memref<16x32xbf16, #tpu.memory_space<vmem>>, %arg6: memref<16x2xf32, #tpu.memory_space<vmem>>, %arg7: memref<16x2xi32, #tpu.memory_space<vmem>>, %arg8: memref<1x1x8xf32, #tpu.memory_space<vmem>>) attributes {dimension_semantics = [#tpu.dimension_semantics<parallel>], iteration_bounds = array<i64: 1>, scalar_prefetch = 0 : i64, scratch_operands = 0 : i64, tpu.core_type = #tpu.core_type<tc>, window_params = [{transform_indices = @transform_0, window_bounds = array<i64: 16, 32>}, {pipeline_mode = #tpu.pipeline_mode<synchronous>, transform_indices = @transform_1, window_bounds = array<i64: 32, 8>}, {pipeline_mode = #tpu.pipeline_mode<synchronous>, transform_indices = @transform_2, window_bounds = array<i64: 1, 8>}, {pipeline_mode = #tpu.pipeline_mode<synchronous>, transform_indices = @transform_3, window_bounds = array<i64: 1, 32>}, {transform_indices = @transform_4, window_bounds = array<i64: 16, 32>}, {transform_indices = @transform_5, window_bounds = array<i64: 16, 2>}, {transform_indices = @transform_6, window_bounds = array<i64: 16, 2>}, {transform_indices = @transform_7, window_bounds = array<i64: 1, 1, 8>}]} {
    %c0 = arith.constant 0 : index
    %c0_0 = arith.constant 0 : index
    %0 = vector.load %arg1[%c0, %c0_0] : memref<16x32xf32, #tpu.memory_space<vmem>>, vector<16x32xf32>
    %1 = arith.mulf %0, %0 : vector<16x32xf32>
    %cst = arith.constant dense<0.000000e+00> : vector<16xf32>
    %2 = vector.multi_reduction <add>, %1, %cst [1] : vector<16x32xf32> to vector<16xf32>
    %3 = vector.shape_cast %2 : vector<16xf32> to vector<16x1xf32>
    %cst_1 = arith.constant 3.200000e+01 : f32
    %4 = vector.broadcast %cst_1 : f32 to vector<16x1xf32>
    %5 = arith.divf %3, %4 : vector<16x1xf32>
    %cst_2 = arith.constant 1.000000e-07 : f32
    %6 = vector.broadcast %cst_2 : f32 to vector<16x1xf32>
    %7 = arith.addf %5, %6 : vector<16x1xf32>
    %8 = math.rsqrt %7 : vector<16x1xf32>
    %9 = vector.broadcast %8 : vector<16x1xf32> to vector<16x32xf32>
    %10 = arith.mulf %0, %9 : vector<16x32xf32>
    %c0_3 = arith.constant 0 : index
    %c0_4 = arith.constant 0 : index
    %11 = vector.load %arg4[%c0_3, %c0_4] : memref<1x32xf32, #tpu.memory_space<vmem>>, vector<1x32xf32>
    %12 = vector.broadcast %11 : vector<1x32xf32> to vector<16x32xf32>
    %13 = arith.mulf %10, %12 : vector<16x32xf32>
    %14 = arith.truncf %13 : vector<16x32xf32> to vector<16x32xbf16>
    %c0_5 = arith.constant 0 : index
    %c0_6 = arith.constant 0 : index
    %15 = vector.load %arg5[%c0_5, %c0_6] : memref<16x32xbf16, #tpu.memory_space<vmem>>, vector<16x32xbf16>
    tpu.vector_store %arg5[%c0_5, %c0_6], %14 {strides = array<i32>} : memref<16x32xbf16, #tpu.memory_space<vmem>>, vector<16x32xbf16>,
    %c0_7 = arith.constant 0 : index
    %c0_8 = arith.constant 0 : index
    %16 = vector.load %arg2[%c0_7, %c0_8] : memref<32x8xf32, #tpu.memory_space<vmem>>, vector<32x8xf32>
    %cst_9 = arith.constant dense<0.000000e+00> : vector<16x8xf32>
    %17 = tpu.matmul %13, %16, %cst_9 {dimension_numbers = #tpu.dot_dimension_numbers<[1], [0], [0], [1], [0, 0, 1, 1], [], []>} : vector<16x32xf32>, vector<32x8xf32>, vector<16x8xf32> -> vector<16x8xf32>
    %c0_10 = arith.constant 0 : index
    %c0_11 = arith.constant 0 : index
    %18 = vector.load %arg3[%c0_10, %c0_11] : memref<1x8xf32, #tpu.memory_space<vmem>>, vector<1x8xf32>
    %19 = vector.broadcast %18 : vector<1x8xf32> to vector<16x8xf32>
    %20 = arith.addf %17, %19 : vector<16x8xf32>
    %cst_12 = arith.constant dense<0xFF800000> : vector<16xf32>
    %21 = vector.multi_reduction <maximumf>, %20, %cst_12 [1] : vector<16x8xf32> to vector<16xf32>
    %22 = vector.shape_cast %21 : vector<16xf32> to vector<16x1xf32>
    %23 = vector.broadcast %22 : vector<16x1xf32> to vector<16x8xf32>
    %24 = arith.subf %20, %23 : vector<16x8xf32>
    %25 = math.exp %24 : vector<16x8xf32>
    %cst_13 = arith.constant dense<0.000000e+00> : vector<16xf32>
    %26 = vector.multi_reduction <add>, %25, %cst_13 [1] : vector<16x8xf32> to vector<16xf32>
    %27 = vector.shape_cast %26 : vector<16xf32> to vector<16x1xf32>
    %28 = vector.broadcast %27 : vector<16x1xf32> to vector<16x8xf32>
    %29 = arith.divf %25, %28 : vector<16x8xf32>
    %c16_i32 = arith.constant 16 : i32
    %30 = arith.muli %arg0, %c16_i32 : i32
    %31 = tpu.iota {dimensions = array<i32: 0>} : vector<16x1xi32>
    %32 = vector.broadcast %30 : i32 to vector<16x1xi32>
    %33 = arith.addi %32, %31 : vector<16x1xi32>
    %c16_i32_14 = arith.constant 16 : i32
    %34 = vector.broadcast %c16_i32_14 : i32 to vector<16x1xi32>
    %35 = arith.cmpi slt, %33, %34 : vector<16x1xi32>
    %cst_15 = arith.constant 0.000000e+00 : f32
    %36 = vector.shape_cast %35 : vector<16x1xi1> to vector<16x1xi1>
    %37 = vector.broadcast %36 : vector<16x1xi1> to vector<16x8xi1>
    %38 = vector.broadcast %cst_15 : f32 to vector<16x8xf32>
    %39 = arith.select %37, %29, %38 : vector<16x8xi1>, vector<16x8xf32>
    %cst_16 = arith.constant dense<0.000000e+00> : vector<8xf32>
    %40 = vector.multi_reduction <add>, %39, %cst_16 [0] : vector<16x8xf32> to vector<8xf32>
    %41 = vector.shape_cast %40 : vector<8xf32> to vector<1x8xf32>
    %42 = vector.shape_cast %41 : vector<1x8xf32> to vector<1x1x8xf32>
    %c0_17 = arith.constant 0 : index
    %c0_18 = arith.constant 0 : index
    %c0_19 = arith.constant 0 : index
    %43 = vector.load %arg8[%c0_17, %c0_18, %c0_19] : memref<1x1x8xf32, #tpu.memory_space<vmem>>, vector<1x1x8xf32>
    tpu.vector_store %arg8[%c0_17, %c0_18, %c0_19], %42 {strides = array<i32>} : memref<1x1x8xf32, #tpu.memory_space<vmem>>, vector<1x1x8xf32>,
    %44 = tpu.iota {dimensions = array<i32: 1>} : vector<16x8xi32>
    %cst_20 = arith.constant dense<0xFF800000> : vector<16xf32>
    %45 = vector.multi_reduction <maximumf>, %29, %cst_20 [1] : vector<16x8xf32> to vector<16xf32>
    %46 = vector.shape_cast %45 : vector<16xf32> to vector<16x1xf32>
    %47 = vector.broadcast %46 : vector<16x1xf32> to vector<16x8xf32>
    %48 = arith.cmpf oeq, %29, %47 : vector<16x8xf32>
    %c8_i32 = arith.constant 8 : i32
    %49 = vector.broadcast %c8_i32 : i32 to vector<16x8xi32>
    %50 = arith.select %48, %44, %49 : vector<16x8xi1>, vector<16x8xi32>
    %cst_21 = arith.constant dense<2147483647> : vector<16xi32>
    %51 = vector.multi_reduction <minsi>, %50, %cst_21 [1] : vector<16x8xi32> to vector<16xi32>
    %52 = vector.shape_cast %51 : vector<16xi32> to vector<16x1xi32>
    %53 = vector.broadcast %52 : vector<16x1xi32> to vector<16x8xi32>
    %54 = arith.cmpi eq, %44, %53 : vector<16x8xi32>
    %cst_22 = arith.constant -1.000000e+00 : f32
    %55 = vector.broadcast %cst_22 : f32 to vector<16x8xf32>
    %56 = arith.select %54, %55, %29 : vector<16x8xi1>, vector<16x8xf32>
    %cst_23 = arith.constant dense<0xFF800000> : vector<16xf32>
    %57 = vector.multi_reduction <maximumf>, %56, %cst_23 [1] : vector<16x8xf32> to vector<16xf32>
    %58 = vector.shape_cast %57 : vector<16xf32> to vector<16x1xf32>
    %59 = vector.broadcast %58 : vector<16x1xf32> to vector<16x8xf32>
    %60 = arith.cmpf oeq, %56, %59 : vector<16x8xf32>
    %c8_i32_24 = arith.constant 8 : i32
    %61 = vector.broadcast %c8_i32_24 : i32 to vector<16x8xi32>
    %62 = arith.select %60, %44, %61 : vector<16x8xi1>, vector<16x8xi32>
    %cst_25 = arith.constant dense<2147483647> : vector<16xi32>
    %63 = vector.multi_reduction <minsi>, %62, %cst_25 [1] : vector<16x8xi32> to vector<16xi32>
    %64 = vector.shape_cast %63 : vector<16xi32> to vector<16x1xi32>
    %65 = tpu.concatenate %46, %58 in 1 : vector<16x1xf32>, vector<16x1xf32> -> vector<16x2xf32>
    %66 = tpu.concatenate %52, %64 in 1 : vector<16x1xi32>, vector<16x1xi32> -> vector<16x2xi32>
    %cst_26 = arith.constant dense<0.000000e+00> : vector<16xf32>
    %67 = vector.multi_reduction <add>, %65, %cst_26 [1] : vector<16x2xf32> to vector<16xf32>
    %68 = vector.shape_cast %67 : vector<16xf32> to vector<16x1xf32>
    %69 = vector.broadcast %68 : vector<16x1xf32> to vector<16x2xf32>
    %70 = arith.divf %65, %69 : vector<16x2xf32>
    %c0_27 = arith.constant 0 : index
    %c0_28 = arith.constant 0 : index
    %71 = vector.load %arg6[%c0_27, %c0_28] : memref<16x2xf32, #tpu.memory_space<vmem>>, vector<16x2xf32>
    tpu.vector_store %arg6[%c0_27, %c0_28], %70 {strides = array<i32>} : memref<16x2xf32, #tpu.memory_space<vmem>>, vector<16x2xf32>,
    %c0_29 = arith.constant 0 : index
    %c0_30 = arith.constant 0 : index
    %72 = vector.load %arg7[%c0_29, %c0_30] : memref<16x2xi32, #tpu.memory_space<vmem>>, vector<16x2xi32>
    tpu.vector_store %arg7[%c0_29, %c0_30], %66 {strides = array<i32>} : memref<16x2xi32, #tpu.memory_space<vmem>>, vector<16x2xi32>,
    return
  }
  func.func @transform_0(%arg0: i32) -> (i32, i32) {
    %c0_i32 = arith.constant 0 : i32
    %c0_i32_0 = arith.constant 0 : i32
    return %arg0, %c0_i32 : i32, i32
  }
  func.func @transform_1(%arg0: i32) -> (i32, i32) {
    %c0_i32 = arith.constant 0 : i32
    %c0_i32_0 = arith.constant 0 : i32
    %c0_i32_1 = arith.constant 0 : i32
    return %c0_i32, %c0_i32_0 : i32, i32
  }
  func.func @transform_2(%arg0: i32) -> (i32, i32) {
    %c0_i32 = arith.constant 0 : i32
    %c0_i32_0 = arith.constant 0 : i32
    %c0_i32_1 = arith.constant 0 : i32
    return %c0_i32, %c0_i32_0 : i32, i32
  }
  func.func @transform_3(%arg0: i32) -> (i32, i32) {
    %c0_i32 = arith.constant 0 : i32
    %c0_i32_0 = arith.constant 0 : i32
    %c0_i32_1 = arith.constant 0 : i32
    return %c0_i32, %c0_i32_0 : i32, i32
  }
  func.func @transform_4(%arg0: i32) -> (i32, i32) {
    %c0_i32 = arith.constant 0 : i32
    %c0_i32_0 = arith.constant 0 : i32
    return %arg0, %c0_i32 : i32, i32
  }
  func.func @transform_5(%arg0: i32) -> (i32, i32) {
    %c0_i32 = arith.constant 0 : i32
    %c0_i32_0 = arith.constant 0 : i32
    return %arg0, %c0_i32 : i32, i32
  }
  func.func @transform_6(%arg0: i32) -> (i32, i32) {
    %c0_i32 = arith.constant 0 : i32
    %c0_i32_0 = arith.constant 0 : i32
    return %arg0, %c0_i32 : i32, i32
  }
  func.func @transform_7(%arg0: i32) -> (i32, i32, i32) {
    %c0_i32 = arith.constant 0 : i32
    %c0_i32_0 = arith.constant 0 : i32
    %c0_i32_1 = arith.constant 0 : i32
    return %arg0, %c0_i32, %c0_i32_0 : i32, i32, i32
  }
}

module attributes {stable_mosaic.version = 11 : i64} {
  func.func @_expert_kernel(%arg0: i32, %arg1: i32, %arg2: i32, %arg3: memref<16x32xbf16, #tpu.memory_space<vmem>>, %arg4: memref<16x2xf32, #tpu.memory_space<vmem>>, %arg5: memref<16x2xi32, #tpu.memory_space<vmem>>, %arg6: memref<1x32x64xbf16, #tpu.memory_space<vmem>>, %arg7: memref<1x1x64xf32, #tpu.memory_space<vmem>>, %arg8: memref<1x32x64xbf16, #tpu.memory_space<vmem>>, %arg9: memref<1x1x64xf32, #tpu.memory_space<vmem>>, %arg10: memref<1x64x32xbf16, #tpu.memory_space<vmem>>, %arg11: memref<1x1x32xf32, #tpu.memory_space<vmem>>, %arg12: memref<16x32xf32, #tpu.memory_space<vmem>>, %arg13: memref<16x32xf32, #tpu.memory_space<vmem>>) attributes {dimension_semantics = [#tpu.dimension_semantics<parallel>, #tpu.dimension_semantics<arbitrary>, #tpu.dimension_semantics<arbitrary>], iteration_bounds = array<i64: 1, 8, 1>, scalar_prefetch = 0 : i64, scratch_operands = 1 : i64, tpu.core_type = #tpu.core_type<tc>, window_params = [{transform_indices = @transform_0, window_bounds = array<i64: 16, 32>}, {transform_indices = @transform_1, window_bounds = array<i64: 16, 2>}, {transform_indices = @transform_2, window_bounds = array<i64: 16, 2>}, {transform_indices = @transform_3, window_bounds = array<i64: 1, 32, 64>}, {transform_indices = @transform_4, window_bounds = array<i64: 1, 1, 64>}, {transform_indices = @transform_5, window_bounds = array<i64: 1, 32, 64>}, {transform_indices = @transform_6, window_bounds = array<i64: 1, 1, 64>}, {transform_indices = @transform_7, window_bounds = array<i64: 1, 64, 32>}, {transform_indices = @transform_8, window_bounds = array<i64: 1, 1, 32>}, {transform_indices = @transform_9, window_bounds = array<i64: 16, 32>}]} {
    %c0_i32 = arith.constant 0 : i32
    %0 = arith.cmpi eq, %arg1, %c0_i32 : i32
    %c0_i32_0 = arith.constant 0 : i32
    %1 = arith.cmpi eq, %arg2, %c0_i32_0 : i32
    %2 = arith.andi %0, %1 : i1
    %3 = arith.extui %2 : i1 to i32
    %c0_i32_1 = arith.constant 0 : i32
    %4 = arith.cmpi ne, %3, %c0_i32_1 : i32
    scf.if %4 {
      %cst_11 = arith.constant 0.000000e+00 : f32
      %25 = vector.broadcast %cst_11 : f32 to vector<16x32xf32>
      %c0_12 = arith.constant 0 : index
      %c0_13 = arith.constant 0 : index
      %26 = vector.load %arg13[%c0_12, %c0_13] : memref<16x32xf32, #tpu.memory_space<vmem>>, vector<16x32xf32>
      tpu.vector_store %arg13[%c0_12, %c0_13], %25 {strides = array<i32>} : memref<16x32xf32, #tpu.memory_space<vmem>>, vector<16x32xf32>,
    } else {
    }
    %c0 = arith.constant 0 : index
    %c0_2 = arith.constant 0 : index
    %5 = vector.load %arg5[%c0, %c0_2] : memref<16x2xi32, #tpu.memory_space<vmem>>, vector<16x2xi32>
    %6 = vector.broadcast %arg1 : i32 to vector<16x2xi32>
    %7 = arith.cmpi eq, %5, %6 : vector<16x2xi32>
    %c0_3 = arith.constant 0 : index
    %c0_4 = arith.constant 0 : index
    %8 = vector.load %arg4[%c0_3, %c0_4] : memref<16x2xf32, #tpu.memory_space<vmem>>, vector<16x2xf32>
    %cst = arith.constant 0.000000e+00 : f32
    %9 = vector.broadcast %cst : f32 to vector<16x2xf32>
    %10 = arith.select %7, %8, %9 : vector<16x2xi1>, vector<16x2xf32>
    %cst_5 = arith.constant dense<0.000000e+00> : vector<16xf32>
    %11 = vector.multi_reduction <add>, %10, %cst_5 [1] : vector<16x2xf32> to vector<16xf32>
    %12 = vector.shape_cast %11 : vector<16xf32> to vector<16x1xf32>
    %13 = vector.shape_cast %12 : vector<16x1xf32> to vector<1x16x1xf32>
    %cst_6 = arith.constant dense<0xFF800000> : vector<1xf32>
    %14 = vector.multi_reduction <maximumf>, %13, %cst_6 [1, 2] : vector<1x16x1xf32> to vector<1xf32>
    %15 = vector.shape_cast %14 : vector<1xf32> to vector<1x1x1xf32>
    %16 = vector.extract %15[0, 0, 0] : f32 from vector<1x1x1xf32>
    %cst_7 = arith.constant 0.000000e+00 : f32
    %17 = arith.cmpf ogt, %16, %cst_7 : f32
    %18 = arith.extui %17 : i1 to i32
    %c0_i32_8 = arith.constant 0 : i32
    %19 = arith.cmpi ne, %18, %c0_i32_8 : i32
    scf.if %19 {
      %c0_11 = arith.constant 0 : index
      %c0_12 = arith.constant 0 : index
      %25 = vector.load %arg3[%c0_11, %c0_12] : memref<16x32xbf16, #tpu.memory_space<vmem>>, vector<16x32xbf16>
      %c0_13 = arith.constant 0 : index
      %c0_14 = arith.constant 0 : index
      %c0_15 = arith.constant 0 : index
      %26 = vector.load %arg6[%c0_13, %c0_14, %c0_15] : memref<1x32x64xbf16, #tpu.memory_space<vmem>>, vector<1x32x64xbf16>
      %27 = vector.shape_cast %26 : vector<1x32x64xbf16> to vector<32x64xbf16>
      %cst_16 = arith.constant dense<0.000000e+00> : vector<16x64xf32>
      %28 = tpu.matmul %25, %27, %cst_16 {dimension_numbers = #tpu.dot_dimension_numbers<[1], [0], [0], [1], [0, 0, 1, 1], [], []>} : vector<16x32xbf16>, vector<32x64xbf16>, vector<16x64xf32> -> vector<16x64xf32>
      %c0_17 = arith.constant 0 : index
      %c0_18 = arith.constant 0 : index
      %c0_19 = arith.constant 0 : index
      %29 = vector.load %arg7[%c0_17, %c0_18, %c0_19] : memref<1x1x64xf32, #tpu.memory_space<vmem>>, vector<1x1x64xf32>
      %30 = vector.shape_cast %29 : vector<1x1x64xf32> to vector<1x64xf32>
      %31 = vector.broadcast %30 : vector<1x64xf32> to vector<16x64xf32>
      %32 = arith.addf %28, %31 : vector<16x64xf32>
      %c0_20 = arith.constant 0 : index
      %c0_21 = arith.constant 0 : index
      %c0_22 = arith.constant 0 : index
      %33 = vector.load %arg8[%c0_20, %c0_21, %c0_22] : memref<1x32x64xbf16, #tpu.memory_space<vmem>>, vector<1x32x64xbf16>
      %34 = vector.shape_cast %33 : vector<1x32x64xbf16> to vector<32x64xbf16>
      %cst_23 = arith.constant dense<0.000000e+00> : vector<16x64xf32>
      %35 = tpu.matmul %25, %34, %cst_23 {dimension_numbers = #tpu.dot_dimension_numbers<[1], [0], [0], [1], [0, 0, 1, 1], [], []>} : vector<16x32xbf16>, vector<32x64xbf16>, vector<16x64xf32> -> vector<16x64xf32>
      %c0_24 = arith.constant 0 : index
      %c0_25 = arith.constant 0 : index
      %c0_26 = arith.constant 0 : index
      %36 = vector.load %arg9[%c0_24, %c0_25, %c0_26] : memref<1x1x64xf32, #tpu.memory_space<vmem>>, vector<1x1x64xf32>
      %37 = vector.shape_cast %36 : vector<1x1x64xf32> to vector<1x64xf32>
      %38 = vector.broadcast %37 : vector<1x64xf32> to vector<16x64xf32>
      %39 = arith.addf %35, %38 : vector<16x64xf32>
      %cst_27 = arith.constant 0.000000e+00 : f32
      %40 = vector.broadcast %cst_27 : f32 to vector<16x64xf32>
      %41 = arith.subf %40, %32 : vector<16x64xf32>
      %42 = math.exp %41 : vector<16x64xf32>
      %cst_28 = arith.constant 1.000000e+00 : f32
      %43 = vector.broadcast %cst_28 : f32 to vector<16x64xf32>
      %44 = arith.addf %43, %42 : vector<16x64xf32>
      %cst_29 = arith.constant 1.000000e+00 : f32
      %45 = vector.broadcast %cst_29 : f32 to vector<16x64xf32>
      %46 = arith.divf %45, %44 : vector<16x64xf32>
      %47 = arith.mulf %32, %46 : vector<16x64xf32>
      %48 = arith.mulf %47, %39 : vector<16x64xf32>
      %49 = arith.truncf %48 : vector<16x64xf32> to vector<16x64xbf16>
      %c0_30 = arith.constant 0 : index
      %c0_31 = arith.constant 0 : index
      %c0_32 = arith.constant 0 : index
      %50 = vector.load %arg10[%c0_30, %c0_31, %c0_32] : memref<1x64x32xbf16, #tpu.memory_space<vmem>>, vector<1x64x32xbf16>
      %51 = vector.shape_cast %50 : vector<1x64x32xbf16> to vector<64x32xbf16>
      %cst_33 = arith.constant dense<0.000000e+00> : vector<16x32xf32>
      %52 = tpu.matmul %49, %51, %cst_33 {dimension_numbers = #tpu.dot_dimension_numbers<[1], [0], [0], [1], [0, 0, 1, 1], [], []>} : vector<16x64xbf16>, vector<64x32xbf16>, vector<16x32xf32> -> vector<16x32xf32>
      %c0_i32_34 = arith.constant 0 : i32
      %53 = arith.cmpi eq, %arg2, %c0_i32_34 : i32
      %cst_35 = arith.constant 1.000000e+00 : f32
      %cst_36 = arith.constant 0.000000e+00 : f32
      %54 = arith.select %53, %cst_35, %cst_36 : f32
      %c0_37 = arith.constant 0 : index
      %c0_38 = arith.constant 0 : index
      %c0_39 = arith.constant 0 : index
      %55 = vector.load %arg11[%c0_37, %c0_38, %c0_39] : memref<1x1x32xf32, #tpu.memory_space<vmem>>, vector<1x1x32xf32>
      %56 = vector.shape_cast %55 : vector<1x1x32xf32> to vector<1x32xf32>
      %57 = vector.broadcast %54 : f32 to vector<1x32xf32>
      %58 = arith.mulf %57, %56 : vector<1x32xf32>
      %59 = vector.broadcast %58 : vector<1x32xf32> to vector<16x32xf32>
      %60 = arith.addf %52, %59 : vector<16x32xf32>
      %c0_40 = arith.constant 0 : index
      %c0_41 = arith.constant 0 : index
      %61 = vector.load %arg13[%c0_40, %c0_41] : memref<16x32xf32, #tpu.memory_space<vmem>>, vector<16x32xf32>
      %62 = vector.broadcast %12 : vector<16x1xf32> to vector<16x32xf32>
      %63 = arith.mulf %62, %60 : vector<16x32xf32>
      %64 = arith.addf %61, %63 : vector<16x32xf32>
      %c0_42 = arith.constant 0 : index
      %c0_43 = arith.constant 0 : index
      %65 = vector.load %arg13[%c0_42, %c0_43] : memref<16x32xf32, #tpu.memory_space<vmem>>, vector<16x32xf32>
      tpu.vector_store %arg13[%c0_42, %c0_43], %64 {strides = array<i32>} : memref<16x32xf32, #tpu.memory_space<vmem>>, vector<16x32xf32>,
    } else {
    }
    %c7_i32 = arith.constant 7 : i32
    %20 = arith.cmpi eq, %arg1, %c7_i32 : i32
    %c0_i32_9 = arith.constant 0 : i32
    %21 = arith.cmpi eq, %arg2, %c0_i32_9 : i32
    %22 = arith.andi %20, %21 : i1
    %23 = arith.extui %22 : i1 to i32
    %c0_i32_10 = arith.constant 0 : i32
    %24 = arith.cmpi ne, %23, %c0_i32_10 : i32
    scf.if %24 {
      %c0_11 = arith.constant 0 : index
      %c0_12 = arith.constant 0 : index
      %25 = vector.load %arg13[%c0_11, %c0_12] : memref<16x32xf32, #tpu.memory_space<vmem>>, vector<16x32xf32>
      %c0_13 = arith.constant 0 : index
      %c0_14 = arith.constant 0 : index
      %26 = vector.load %arg12[%c0_13, %c0_14] : memref<16x32xf32, #tpu.memory_space<vmem>>, vector<16x32xf32>
      tpu.vector_store %arg12[%c0_13, %c0_14], %25 {strides = array<i32>} : memref<16x32xf32, #tpu.memory_space<vmem>>, vector<16x32xf32>,
    } else {
    }
    return
  }
  func.func @transform_0(%arg0: i32, %arg1: i32, %arg2: i32) -> (i32, i32) {
    %c0_i32 = arith.constant 0 : i32
    %c0_i32_0 = arith.constant 0 : i32
    return %arg0, %c0_i32 : i32, i32
  }
  func.func @transform_1(%arg0: i32, %arg1: i32, %arg2: i32) -> (i32, i32) {
    %c0_i32 = arith.constant 0 : i32
    %c0_i32_0 = arith.constant 0 : i32
    return %arg0, %c0_i32 : i32, i32
  }
  func.func @transform_2(%arg0: i32, %arg1: i32, %arg2: i32) -> (i32, i32) {
    %c0_i32 = arith.constant 0 : i32
    %c0_i32_0 = arith.constant 0 : i32
    return %arg0, %c0_i32 : i32, i32
  }
  func.func @transform_3(%arg0: i32, %arg1: i32, %arg2: i32) -> (i32, i32, i32) {
    %c0_i32 = arith.constant 0 : i32
    %c0_i32_0 = arith.constant 0 : i32
    return %arg1, %c0_i32, %arg2 : i32, i32, i32
  }
  func.func @transform_4(%arg0: i32, %arg1: i32, %arg2: i32) -> (i32, i32, i32) {
    %c0_i32 = arith.constant 0 : i32
    %c0_i32_0 = arith.constant 0 : i32
    return %arg1, %c0_i32, %arg2 : i32, i32, i32
  }
  func.func @transform_5(%arg0: i32, %arg1: i32, %arg2: i32) -> (i32, i32, i32) {
    %c0_i32 = arith.constant 0 : i32
    %c0_i32_0 = arith.constant 0 : i32
    return %arg1, %c0_i32, %arg2 : i32, i32, i32
  }
  func.func @transform_6(%arg0: i32, %arg1: i32, %arg2: i32) -> (i32, i32, i32) {
    %c0_i32 = arith.constant 0 : i32
    %c0_i32_0 = arith.constant 0 : i32
    return %arg1, %c0_i32, %arg2 : i32, i32, i32
  }
  func.func @transform_7(%arg0: i32, %arg1: i32, %arg2: i32) -> (i32, i32, i32) {
    %c0_i32 = arith.constant 0 : i32
    %c0_i32_0 = arith.constant 0 : i32
    return %arg1, %arg2, %c0_i32 : i32, i32, i32
  }
  func.func @transform_8(%arg0: i32, %arg1: i32, %arg2: i32) -> (i32, i32, i32) {
    %c0_i32 = arith.constant 0 : i32
    %c0_i32_0 = arith.constant 0 : i32
    %c0_i32_1 = arith.constant 0 : i32
    return %arg1, %c0_i32, %c0_i32_0 : i32, i32, i32
  }
  func.func @transform_9(%arg0: i32, %arg1: i32, %arg2: i32) -> (i32, i32) {
    %c0_i32 = arith.constant 0 : i32
    %c0_i32_0 = arith.constant 0 : i32
    return %arg0, %c0_i32 : i32, i32
  }
}

</mosaic_0001>

<llo_original>
// kernel: moe_forward.2
$region0: #{moe_forward.2}
  #allocation0 [shape = 'u32[]', space=smem, size = 0x4, offset = 0x4, fixed_abs, tag = 'smem constant byte address 0x4 - core index']
  #allocation1 [shape = 'u32[144,128]{1,0:T(1,128)}', space=vmem, size = 0x12000, scoped, tag = 'internal scratch']
  %s0 = inlined_call_operand.vmem [shape: f32[16,32], index: 0, kind: input, shape index: {}]
  %s1 = inlined_call_operand.vmem [shape: f32[32,8], index: 1, kind: input, shape index: {}]
  %s2 = inlined_call_operand.vmem [shape: f32[1,8], index: 2, kind: input, shape index: {}]
  %s3 = inlined_call_operand.vmem [shape: f32[1,32], index: 3, kind: input, shape index: {}]
  %s4 = inlined_call_operand.vmem [shape: bf16[16,32], index: 4, kind: output, shape index: {0}]
  %s5 = inlined_call_operand.vmem [shape: f32[16,2], index: 5, kind: output, shape index: {1}]
  %s6 = inlined_call_operand.vmem [shape: s32[16,2], index: 6, kind: output, shape index: {2}]
  %s7 = inlined_call_operand.vmem [shape: f32[1,1,8], index: 7, kind: output, shape index: {3}]
  %8 = xla_tuple %s4, %s5, %s6, %s7
  %s9 = sld [smem:[#allocation0]]
  $region50: #{moe_forward.2} parent=0
    _
  %s11 = ssub.s32 1, %s9
  %s12 = scalar_select 0, %s11, %s9
  // Predicated region
  $region2: #{moe_forward.2} parent=0 // pred_check
    _
  $region3: #{moe_forward.2} parent=0 // pred_check_branch
    %14 = sbr.rel (0) target = $region5
  $region4: #{moe_forward.2} parent=0 // pred_region
    _
  $region5: #{moe_forward.2} parent=0 // pred_fallthru
    _
  // Predicated region
  $region6: #{moe_forward.2} parent=0 // pred_check
    _
  $region7: #{moe_forward.2} parent=0 // pred_check_branch
    %16 = sbr.rel (0) target = $region9
  $region8: #{moe_forward.2} parent=0 // pred_region
    _
  $region9: #{moe_forward.2} parent=0 // pred_fallthru
    _
  // Predicated region
  $region10: #{moe_forward.2} parent=0 // pred_check
    _
  $region11: #{moe_forward.2} parent=0 // pred_check_branch
    %18 = sbr.rel (0) target = $region13
  $region12: #{moe_forward.2} parent=0 // pred_region
    _
  $region13: #{moe_forward.2} parent=0 // pred_fallthru
    _
  // Predicated region
  $region14: #{moe_forward.2} parent=0 // pred_check
    _
  $region15: #{moe_forward.2} parent=0 // pred_check_branch
    %20 = sbr.rel (0) target = $region17
  $region16: #{moe_forward.2} parent=0 // pred_region
    _
  $region17: #{moe_forward.2} parent=0 // pred_fallthru
    _
  %v21 = vld [vmem:[%s0] sm:$0xff]
  %v22 = vld [vmem:[%s0 + $0x8] sm:$0xff]
  %v23 = vmul.f32 %v21, %v21
  %v24 = vmul.f32 %v22, %v22
  %vm25 = vcmask 261120
  %v26 = vsel %vm25, %v23, 0.0
  %27 = vadd.xlane.f32.xlu0 %v26
  %v28 = vpop.xlane.xlu0 %27
  %v29 = vsel %vm25, %v24, 0.0
  %30 = vadd.xlane.f32.xlu0 %v29
  %v31 = vpop.xlane.xlu0 %30
  %v32 = vrcp.pop 32.0
  %v33 = vmul.f32 %v28, %v32
  %v34 = vmul.f32 %v31, %v32
  %v35 = vadd.f32 %v33, 1e-07
  %v36 = vadd.f32 %v34, 1e-07
  %v37 = vrsqrt.pop %v35
  %v38 = vrsqrt.pop %v36
  %v39 = vmul.f32 %v21, %v37
  %v40 = vmul.f32 %v22, %v38
  %v41 = vld [vmem:[%s3] sm:$0x1]
  %v43 = vlaneseq
  %v44 = vshrl.u32 %v43, 7
  %v45 = vsub.s32 0, %v44
  %v46 = vrot.slane %v41, %v45
  %v48 = vmul.f32 %v39, %v46
  %v49 = vmul.f32 %v40, %v46
  %v50 = vpack.c.bf16 %v49, %v48
  %v52 = vunpack.c.l.b16 %v50
  %v53 = vunpack.c.h.b16 %v50
  %v54 = vpack.c.b16 %v52, %v52
  %v55 = vpack.c.b16 %v53, %v53
  %vm58 = vcmask 257024
  %59 = vst.msk [vmem:[%s4] sm:$0xf] %vm58, %v54
  %60 = vst.msk [vmem:[%s4 + $0x4] sm:$0xf] %vm58, %v55
  %v61 = vld [vmem:[%s1] sm:$0xff]
  %v62 = vld [vmem:[%s1 + $0x8] sm:$0xff]
  %v63 = vld [vmem:[%s1 + $0x10] sm:$0xff]
  %v64 = vld [vmem:[%s1 + $0x18] sm:$0xff]
  %v65 = vld [vmem:[%s2] sm:$0x1]
  %v67 = vlaneseq
  %v68 = vshrl.u32 %v67, 7
  %v69 = vsub.s32 0, %v68
  %v70 = vrot.slane %v65, %v69
  %v73 = vsel %vm25, %v48, 0
  %v76 = vsel %vm25, %v49, 0
  %78 = vmatprep.subr.mxu0 0.0
  %79 = vmatpush1.msra.mxu0 0.0
  %80 = vmatprep.subr.mxu0 0.0
  %81 = vmatpush1.msra.mxu0 0.0
  %82 = vmatprep.subr.mxu0 0.0
  %83 = vmatpush1.msra.mxu0 0.0
  %84 = vmatprep.subr.mxu0 0.0
  %85 = vmatpush1.msra.mxu0 0.0
  %86 = vmatprep.subr.mxu0 0.0
  %87 = vmatpush1.msra.mxu0 0.0
  %88 = vmatprep.subr.mxu0 0.0
  %89 = vmatpush1.msra.mxu0 0.0
  %90 = vmatprep.subr.mxu0 0.0
  %91 = vmatpush1.msra.mxu0 0.0
  %92 = vmatprep.subr.mxu0 0.0
  %93 = vmatpush1.msra.mxu0 0.0
  %94 = vmatprep.subr.mxu0 0.0
  %95 = vmatpush1.msra.mxu0 0.0
  %96 = vmatprep.subr.mxu0 0.0
  %97 = vmatpush1.msra.mxu0 0.0
  %98 = vmatprep.subr.mxu0 0.0
  %99 = vmatpush1.msra.mxu0 0.0
  %100 = vmatprep.subr.mxu0 0.0
  %101 = vmatpush1.msra.mxu0 0.0
  %102 = vmatprep.subr.mxu0 0.0
  %103 = vmatpush1.msra.mxu0 %v64
  %104 = vmatprep.subr.mxu0 0.0
  %105 = vmatpush1.msra.mxu0 %v63
  %106 = vmatprep.subr.mxu0 0.0
  %107 = vmatpush1.msra.mxu0 %v62
  %108 = vmatprep.subr.mxu0 0.0
  %109 = vmatpush1.msra.mxu0 %v61
  %110 = vmatprep.subr.mxu0 0.0
  %111 = vmatpush2.msra.mxu0 0.0
  %112 = vmatprep.subr.mxu0 0.0
  %113 = vmatpush2.msra.mxu0 0.0
  %114 = vmatprep.subr.mxu0 0.0
  %115 = vmatpush2.msra.mxu0 0.0
  %116 = vmatprep.subr.mxu0 0.0
  %117 = vmatpush2.msra.mxu0 0.0
  %118 = vmatprep.subr.mxu0 0.0
  %119 = vmatpush2.msra.mxu0 0.0
  %120 = vmatprep.subr.mxu0 0.0
  %121 = vmatpush2.msra.mxu0 0.0
  %122 = vmatprep.subr.mxu0 0.0
  %123 = vmatpush2.msra.mxu0 0.0
  %124 = vmatprep.subr.mxu0 0.0
  %125 = vmatpush2.msra.mxu0 0.0
  %126 = vmatprep.subr.mxu0 0.0
  %127 = vmatpush2.msra.mxu0 0.0
  %128 = vmatprep.subr.mxu0 0.0
  %129 = vmatpush2.msra.mxu0 0.0
  %130 = vmatprep.subr.mxu0 0.0
  %131 = vmatpush2.msra.mxu0 0.0
  %132 = vmatprep.subr.mxu0 0.0
  %133 = vmatpush2.msra.mxu0 0.0
  %134 = vmatprep.subr.mxu0 0.0
  %135 = vmatpush2.msra.mxu0 0.0
  %136 = vmatprep.subr.mxu0 0.0
  %137 = vmatpush2.msra.mxu0 0.0
  %138 = vmatprep.subr.mxu0 0.0
  %139 = vmatpush2.msra.mxu0 0.0
  %140 = vmatprep.subr.mxu0 0.0
  %141 = vmatpush2.msra.mxu0 0.0
  %142 = vmatprep.mubr.f32.mxu0 0.0
  %143 = vmatmul.mubr.f32.gmra.mxu0 %v73
  %v144 = vpop.f32.mrf.mxu0
  %v145 = vadd.f32 %v70, %v144
  %v146 = vpop.f32.mrf.mxu0
  %147 = vmatprep.mubr.f32.mxu0 0.0
  %148 = vmatmul.mubr.f32.gmra.mxu0 %v76
  %v149 = vpop.f32.mrf.mxu0
  %v150 = vadd.f32 %v70, %v149
  %v151 = vpop.f32.mrf.mxu0
  %152 = vdwg.mxu0
  %vm153 = vcmask 64512
  %v154 = vsel %vm153, %v145, -inf
  %155 = vmax.xlane.f32.xlu0 %v154
  %v156 = vpop.xlane.xlu0 %155
  %v157 = vsel %vm153, %v150, -inf
  %158 = vmax.xlane.f32.xlu0 %v157
  %v159 = vpop.xlane.xlu0 %158
  %v160 = vsub.f32 %v145, %v156
  %v161 = vsub.f32 %v150, %v159
  %v162 = vmul.f32 %v160, 1.442695
  %v163 = vpow.pop %v162
  %v164 = vmul.f32 %v161, 1.442695
  %v165 = vpow.pop %v164
  %v166 = vsel %vm153, %v163, 0.0
  %167 = vadd.xlane.f32.xlu0 %v166
  %v168 = vpop.xlane.xlu0 %167
  %v169 = vsel %vm153, %v165, 0.0
  %170 = vadd.xlane.f32.xlu0 %v169
  %v171 = vpop.xlane.xlu0 %170
  %v172 = vrcp.pop %v168
  %v173 = vmul.f32 %v163, %v172
  %v174 = vrcp.pop %v171
  %v175 = vmul.f32 %v165, %v174
  %s176 = smul.u32 0, 16
  %v177 = vlaneseq
  %v178 = vshrl.u32 %v177, 7
  %v179 = vadd.s32 %v178, 8
  %v180 = vstv %s176
  %v181 = vadd.s32 %v180, %v178
  %v182 = vadd.s32 %v180, %v179
  %vm183 = vcmp.lt.s32.totalorder %v181, 16
  %vm184 = vcmp.lt.s32.totalorder %v182, 16
  %v185 = vsel %vm183, 1, 0
  %v186 = vsel %vm184, 1, 0
  %vm187 = vcmp.eq.s32.totalorder %v185, 1
  %vm188 = vcmp.eq.s32.totalorder %v186, 1
  %v189 = vsel %vm187, %v173, 0.0
  %v190 = vsel %vm188, %v175, 0.0
  %v191 = vsel %vm153, %v189, 0.0
  %v192 = vsel %vm153, %v190, 0.0
  %v193 = vadd.f32 %v191, %v192
  %v194 = vrot.slane %v193, 4
  %v195 = vadd.f32 %v193, %v194
  %v196 = vrot.slane %v195, 2
  %v197 = vadd.f32 %v195, %v196
  %v198 = vrot.slane %v197, 1
  %v199 = vadd.f32 %v197, %v198
  %vm200 = vcmask 57344
  %201 = vst.msk [vmem:[%s7] sm:$0x1] %vm200, %v199
  %v202 = vlaneseq
  %v203 = vand.u32 %v202, 127
  %v204 = vsel %vm153, %v173, -inf
  %205 = vmax.xlane.f32.xlu0 %v204
  %v206 = vpop.xlane.xlu0 %205
  %v207 = vsel %vm153, %v175, -inf
  %208 = vmax.xlane.f32.xlu0 %v207
  %v209 = vpop.xlane.xlu0 %208
  %vm210 = vcmp.eq.f32.partialorder %v173, %v206
  %vm211 = vcmp.eq.f32.partialorder %v175, %v209
  %v212 = vsel %vm210, %v203, 8
  %v213 = vsel %vm211, %v203, 8
  %v214 = vsel %vm153, %v212, 2147483647
  %v215 = vand.u32 %v214, 65535
  %v216 = vshra.s32 %v214, 16
  %v217 = vcvt.s32.f32 %v215
  %v218 = vcvt.s32.f32 %v216
  %219 = vmin.xlane.f32.xlu0 %v218
  %v220 = vpop.xlane.xlu0 %219
  %vm221 = vcmp.eq.f32.partialorder %v218, %v220
  %v222 = vsel %vm221, %v217, inf
  %223 = vmin.xlane.f32.xlu0 %v222
  %v224 = vpop.xlane.xlu0 %223
  %v225 = vcvt.f32.s32 %v224
  %v226 = vcvt.f32.s32 %v220
  %v227 = vshll.u32 %v226, 16
  %v228 = vadd.s32 %v227, %v225
  %v229 = vsel %vm153, %v213, 2147483647
  %v230 = vand.u32 %v229, 65535
  %v231 = vshra.s32 %v229, 16
  %v232 = vcvt.s32.f32 %v230
  %v233 = vcvt.s32.f32 %v231
  %234 = vmin.xlane.f32.xlu0 %v233
  %v235 = vpop.xlane.xlu0 %234
  %vm236 = vcmp.eq.f32.partialorder %v233, %v235
  %v237 = vsel %vm236, %v232, inf
  %238 = vmin.xlane.f32.xlu0 %v237
  %v239 = vpop.xlane.xlu0 %238
  %v240 = vcvt.f32.s32 %v239
  %v241 = vcvt.f32.s32 %v235
  %v242 = vshll.u32 %v241, 16
  %v243 = vadd.s32 %v242, %v240
  %vm244 = vcmp.eq.s32.totalorder %v203, %v228
  %vm245 = vcmp.eq.s32.totalorder %v203, %v243
  %v246 = vsel %vm244, -1.0, %v173
  %v247 = vsel %vm245, -1.0, %v175
  %v248 = vsel %vm153, %v246, -inf
  %249 = vmax.xlane.f32.xlu0 %v248
  %v250 = vpop.xlane.xlu0 %249
  %v251 = vsel %vm153, %v247, -inf
  %252 = vmax.xlane.f32.xlu0 %v251
  %v253 = vpop.xlane.xlu0 %252
  %vm254 = vcmp.eq.f32.partialorder %v246, %v250
  %vm255 = vcmp.eq.f32.partialorder %v247, %v253
  %v256 = vsel %vm254, %v203, 8
  %v257 = vsel %vm255, %v203, 8
  %v258 = vsel %vm153, %v256, 2147483647
  %v259 = vand.u32 %v258, 65535
  %v260 = vshra.s32 %v258, 16
  %v261 = vcvt.s32.f32 %v259
  %v262 = vcvt.s32.f32 %v260
  %263 = vmin.xlane.f32.xlu0 %v262
  %v264 = vpop.xlane.xlu0 %263
  %vm265 = vcmp.eq.f32.partialorder %v262, %v264
  %v266 = vsel %vm265, %v261, inf
  %267 = vmin.xlane.f32.xlu0 %v266
  %v268 = vpop.xlane.xlu0 %267
  %v269 = vcvt.f32.s32 %v268
  %v270 = vcvt.f32.s32 %v264
  %v271 = vshll.u32 %v270, 16
  %v272 = vadd.s32 %v271, %v269
  %v273 = vsel %vm153, %v257, 2147483647
  %v274 = vand.u32 %v273, 65535
  %v275 = vshra.s32 %v273, 16
  %v276 = vcvt.s32.f32 %v274
  %v277 = vcvt.s32.f32 %v275
  %278 = vmin.xlane.f32.xlu0 %v277
  %v279 = vpop.xlane.xlu0 %278
  %vm280 = vcmp.eq.f32.partialorder %v277, %v279
  %v281 = vsel %vm280, %v276, inf
  %282 = vmin.xlane.f32.xlu0 %v281
  %v283 = vpop.xlane.xlu0 %282
  %v284 = vcvt.f32.s32 %v283
  %v285 = vcvt.f32.s32 %v279
  %v286 = vshll.u32 %v285, 16
  %v287 = vadd.s32 %v286, %v284
  %vm288 = vcmask 7168
  %v289 = vsel %vm288, %v206, %v250
  %v290 = vsel %vm288, %v209, %v253
  %v291 = vsel %vm288, %v228, %v272
  %v292 = vsel %vm288, %v243, %v287
  %vm293 = vcmask 15360
  %v294 = vsel %vm293, %v289, 0.0
  %295 = vadd.xlane.f32.xlu0 %v294
  %v296 = vpop.xlane.xlu0 %295
  %v297 = vsel %vm293, %v290, 0.0
  %298 = vadd.xlane.f32.xlu0 %v297
  %v299 = vpop.xlane.xlu0 %298
  %v300 = vrcp.pop %v296
  %v301 = vmul.f32 %v289, %v300
  %v302 = vrcp.pop %v299
  %v303 = vmul.f32 %v290, %v302
  %304 = vst.msk [vmem:[%s5] sm:$0xff] %vm293, %v301
  %305 = vst.msk [vmem:[%s5 + $0x8] sm:$0xff] %vm293, %v303
  %306 = vst.msk [vmem:[%s6] sm:$0xff] %vm293, %v291
  %307 = vst.msk [vmem:[%s6 + $0x8] sm:$0xff] %vm293, %v292
  // Predicated region
  $region18: #{moe_forward.2} parent=0 // pred_check
    _
  $region19: #{moe_forward.2} parent=0 // pred_check_branch
    %309 = sbr.rel (0) target = $region21
  $region20: #{moe_forward.2} parent=0 // pred_region
    _
  $region21: #{moe_forward.2} parent=0 // pred_fallthru
    _
  // Predicated region
  $region22: #{moe_forward.2} parent=0 // pred_check
    _
  $region23: #{moe_forward.2} parent=0 // pred_check_branch
    %311 = sbr.rel (0) target = $region25
  $region24: #{moe_forward.2} parent=0 // pred_region
    _
  $region25: #{moe_forward.2} parent=0 // pred_fallthru
    _
  // Predicated region
  $region26: #{moe_forward.2} parent=0 // pred_check
    _
  $region27: #{moe_forward.2} parent=0 // pred_check_branch
    %313 = sbr.rel (0) target = $region29
  $region28: #{moe_forward.2} parent=0 // pred_region
    _
  $region29: #{moe_forward.2} parent=0 // pred_fallthru
    _
  // Predicated region
  $region30: #{moe_forward.2} parent=0 // pred_check
    _
  $region31: #{moe_forward.2} parent=0 // pred_check_branch
    %315 = sbr.rel (0) target = $region33
  $region32: #{moe_forward.2} parent=0 // pred_region
    _
  $region33: #{moe_forward.2} parent=0 // pred_fallthru
    _
  // Predicated region
  $region34: #{moe_forward.2} parent=0 // pred_check
    _
  $region35: #{moe_forward.2} parent=0 // pred_check_branch
    %317 = sbr.rel (0) target = $region37
  $region36: #{moe_forward.2} parent=0 // pred_region
    _
  $region37: #{moe_forward.2} parent=0 // pred_fallthru
    _
  // Predicated region
  $region38: #{moe_forward.2} parent=0 // pred_check
    _
  $region39: #{moe_forward.2} parent=0 // pred_check_branch
    %319 = sbr.rel (0) target = $region41
  $region40: #{moe_forward.2} parent=0 // pred_region
    _
  $region41: #{moe_forward.2} parent=0 // pred_fallthru
    _
  // Predicated region
  $region42: #{moe_forward.2} parent=0 // pred_check
    _
  $region43: #{moe_forward.2} parent=0 // pred_check_branch
    %321 = sbr.rel (0) target = $region45
  $region44: #{moe_forward.2} parent=0 // pred_region
    _
  $region45: #{moe_forward.2} parent=0 // pred_fallthru
    _
  // Predicated region
  $region46: #{moe_forward.2} parent=0 // pred_check
    _
  $region47: #{moe_forward.2} parent=0 // pred_check_branch
    %323 = sbr.rel (0) target = $region49
  $region48: #{moe_forward.2} parent=0 // pred_region
    _
  $region49: #{moe_forward.2} parent=0 // pred_fallthru
    _

// kernel: moe_forward.3
$region0: #{moe_forward.3}
  #allocation0 [shape = 'u32[]', space=smem, size = 0x4, offset = 0x4, fixed_abs, tag = 'smem constant byte address 0x4 - core index']
  #allocation1 [shape = 'u32[144,128]{1,0:T(1,128)}', space=vmem, size = 0x12000, scoped, tag = 'internal scratch']
  #allocation2 [shape = 'f32[16,32]{1,0:T(8,128)}', space=vmem, size = 0x2000, scoped, tag = 'scratch operand']
  %s0 = inlined_call_operand.vmem [shape: bf16[16,32], index: 0, kind: input, shape index: {}]
  %s1 = inlined_call_operand.vmem [shape: f32[16,2], index: 1, kind: input, shape index: {}]
  %s2 = inlined_call_operand.vmem [shape: s32[16,2], index: 2, kind: input, shape index: {}]
  %s3 = inlined_call_operand.vmem [shape: bf16[8,32,64], index: 3, kind: input, shape index: {}]
  %s4 = inlined_call_operand.vmem [shape: f32[8,1,64], index: 4, kind: input, shape index: {}]
  %s5 = inlined_call_operand.vmem [shape: bf16[8,32,64], index: 5, kind: input, shape index: {}]
  %s6 = inlined_call_operand.vmem [shape: f32[8,1,64], index: 6, kind: input, shape index: {}]
  %s7 = inlined_call_operand.vmem [shape: bf16[8,64,32], index: 7, kind: input, shape index: {}]
  %s8 = inlined_call_operand.vmem [shape: f32[8,1,32], index: 8, kind: input, shape index: {}]
  %s9 = inlined_call_operand.hbm [shape: f32[16,32], index: 9, kind: output, shape index: {}]
  %s10 = sld [smem:[#allocation0]]
  $region81: #{moe_forward.3} parent=0
    _
  %s12 = ssub.s32 1, %s10
  %s13 = scalar_select 0, %s12, %s10
  $region1: #{moe_forward.3} parent=0
    #allocation3 [shape = 'u8[8192]{0}', space=vmem, size = 0x2000, scoped, tag = 'output window, operand 0, single buffered']
    #allocation4 [shape = 's32[2]{0}', space=sflag, size = 0x8, scoped, tag = 'scoped memory for moe_forward.3']
    %14 = vsyncpa [#allocation4], 0
    loop: start=0, step=1, limit=10
    $region2: #{moe_forward.3} parent=1 // loop_pre_header
      _
    $region3: #{moe_forward.3} parent=1 // loop_header
      %s16 = sphi 0, %s20
      %p17 = scmp.ge.s32.totalorder %s16, 10
      %s23 = sphi 0, %s42
      %s24 = sphi 0, %s38
      %s25 = sphi 0, %s34
      %s26 = sphi 0, %s23
      %s27 = sphi 0, %s24
      %s28 = sphi 0, %s25
      %s29 = sphi 0, %s26
      %s30 = sphi 0, %s27
      %s31 = sphi 0, %s28
      %s45 = sphi 0, %s47
      %s48 = sphi 0, %s45
      %s49 = sphi 0, %s48
      %s65 = sphi 0, %s49
      %s71 = sphi 0, %s73
      %s74 = sphi 0, %s71
      %s75 = sphi 0, %s74
      %s91 = sphi 0, %s75
      %s97 = sphi 0, %s99
      %s100 = sphi 0, %s97
      %s101 = sphi 0, %s100
      %s117 = sphi 0, %s101
      %s125 = sphi 0, %s127
      %s128 = sphi 0, %s125
      %s129 = sphi 0, %s128
      %s145 = sphi 0, %s129
      %s153 = sphi 0, %s155
      %s156 = sphi 0, %s153
      %s157 = sphi 0, %s156
      %s173 = sphi 0, %s157
      %s181 = sphi 0, %s183
      %s184 = sphi 0, %s181
      %s185 = sphi 0, %s184
      %s201 = sphi 0, %s185
      %s209 = sphi 0, %s211
      %s212 = sphi 0, %s209
      %s213 = sphi 0, %s212
      %s229 = sphi 0, %s213
      %s237 = sphi 0, %s239
      %s240 = sphi 0, %s237
      %s241 = sphi 0, %s240
      %s257 = sphi 0, %s241
      %s263 = sphi 0, %s265
      %s266 = sphi 0, %s263
      %s267 = sphi 0, %s266
      %s283 = sphi 0, %s267
      %s289 = sphi 0, %s291
      %s292 = sphi 0, %s289
      %s293 = sphi 0, %s292
      %s309 = sphi 0, %s293
    $region4: #{moe_forward.3} parent=1 // loop_header_branch
      %19 = sbr.rel (%p17) target = $region8
    $region5: #{moe_forward.3} parent=1 // loop_body
      %s21 = ssub.s32 %s16, 1
      %s22 = ssub.s32 %s16, 2
      %s32 = sadd.s32 1, %s25
      %p33 = scmp.ge.s32.totalorder %s32, 1
      %s34 = scalar_select %p33, 0, %s32
      %s35 = sadd.s32 1, %s24
      %s36 = scalar_select %p33, %s35, %s24
      %p37 = scmp.ge.s32.totalorder %s36, 8
      %s38 = scalar_select %p37, 0, %s36
      %s39 = sadd.s32 1, %s23
      %s40 = scalar_select %p37, %s39, %s23
      %p41 = scmp.ge.s32.totalorder %s40, 1
      %s42 = scalar_select %p41, 0, %s40
      %s43 = ssub.s32 %s23, %s42
      %p44 = scmp.eq.s32.totalorder %s43, 0
      %s46 = sadd.s32 %s45, 1
      %s47 = scalar_select %p44, %s45, %s46
      %p50 = pneg %p44
      %p51 = scmp.eq.s32.totalorder %s16, 7
      %p52 = por %p50, %p51
      %p53 = scmp.ne.s32.totalorder %s45, %s48
      %p54 = scmp.eq.s32.totalorder %s16, 0
      %p55 = por %p53, %p54
      %p56 = scmp.ne.s32.totalorder %s45, %s48
      %p57 = scmp.eq.s32.totalorder %s21, 7
      %p58 = por %p56, %p57
      %p59 = scmp.ne.s32.totalorder %s48, %s49
      %p60 = scmp.eq.s32.totalorder %s21, 0
      %p61 = por %p59, %p60
      %p62 = scmp.ne.s32.totalorder %s48, %s49
      %p63 = scmp.eq.s32.totalorder %s22, 7
      %p64 = por %p62, %p63
      %p66 = scmp.ne.s32.totalorder %s49, %s65
      %p67 = scmp.eq.s32.totalorder %s22, 0
      %p68 = por %p66, %p67
      %s69 = ssub.s32 %s23, %s42
      %p70 = scmp.eq.s32.totalorder %s69, 0
      %s72 = sadd.s32 %s71, 1
      %s73 = scalar_select %p70, %s71, %s72
      %p76 = pneg %p70
      %p77 = scmp.eq.s32.totalorder %s16, 7
      %p78 = por %p76, %p77
      %p79 = scmp.ne.s32.totalorder %s71, %s74
      %p80 = scmp.eq.s32.totalorder %s16, 0
      %p81 = por %p79, %p80
      %p82 = scmp.ne.s32.totalorder %s71, %s74
      %p83 = scmp.eq.s32.totalorder %s21, 7
      %p84 = por %p82, %p83
      %p85 = scmp.ne.s32.totalorder %s74, %s75
      %p86 = scmp.eq.s32.totalorder %s21, 0
      %p87 = por %p85, %p86
      %p88 = scmp.ne.s32.totalorder %s74, %s75
      %p89 = scmp.eq.s32.totalorder %s22, 7
      %p90 = por %p88, %p89
      %p92 = scmp.ne.s32.totalorder %s75, %s91
      %p93 = scmp.eq.s32.totalorder %s22, 0
      %p94 = por %p92, %p93
      %s95 = ssub.s32 %s23, %s42
      %p96 = scmp.eq.s32.totalorder %s95, 0
      %s98 = sadd.s32 %s97, 1
      %s99 = scalar_select %p96, %s97, %s98
      %p102 = pneg %p96
      %p103 = scmp.eq.s32.totalorder %s16, 7
      %p104 = por %p102, %p103
      %p105 = scmp.ne.s32.totalorder %s97, %s100
      %p106 = scmp.eq.s32.totalorder %s16, 0
      %p107 = por %p105, %p106
      %p108 = scmp.ne.s32.totalorder %s97, %s100
      %p109 = scmp.eq.s32.totalorder %s21, 7
      %p110 = por %p108, %p109
      %p111 = scmp.ne.s32.totalorder %s100, %s101
      %p112 = scmp.eq.s32.totalorder %s21, 0
      %p113 = por %p111, %p112
      %p114 = scmp.ne.s32.totalorder %s100, %s101
      %p115 = scmp.eq.s32.totalorder %s22, 7
      %p116 = por %p114, %p115
      %p118 = scmp.ne.s32.totalorder %s101, %s117
      %p119 = scmp.eq.s32.totalorder %s22, 0
      %p120 = por %p118, %p119
      %s121 = ssub.s32 %s24, %s38
      %s122 = ssub.s32 %s25, %s34
      %s123 = sor.u32 %s121, %s122
      %p124 = scmp.eq.s32.totalorder %s123, 0
      %s126 = sadd.s32 %s125, 1
      %s127 = scalar_select %p124, %s125, %s126
      %p130 = pneg %p124
      %p131 = scmp.eq.s32.totalorder %s16, 7
      %p132 = por %p130, %p131
      %p133 = scmp.ne.s32.totalorder %s125, %s128
      %p134 = scmp.eq.s32.totalorder %s16, 0
      %p135 = por %p133, %p134
      %p136 = scmp.ne.s32.totalorder %s125, %s128
      %p137 = scmp.eq.s32.totalorder %s21, 7
      %p138 = por %p136, %p137
      %p139 = scmp.ne.s32.totalorder %s128, %s129
      %p140 = scmp.eq.s32.totalorder %s21, 0
      %p141 = por %p139, %p140
      %p142 = scmp.ne.s32.totalorder %s128, %s129
      %p143 = scmp.eq.s32.totalorder %s22, 7
      %p144 = por %p142, %p143
      %p146 = scmp.ne.s32.totalorder %s129, %s145
      %p147 = scmp.eq.s32.totalorder %s22, 0
      %p148 = por %p146, %p147
      %s149 = ssub.s32 %s24, %s38
      %s150 = ssub.s32 %s25, %s34
      %s151 = sor.u32 %s149, %s150
      %p152 = scmp.eq.s32.totalorder %s151, 0
      %s154 = sadd.s32 %s153, 1
      %s155 = scalar_select %p152, %s153, %s154
      %p158 = pneg %p152
      %p159 = scmp.eq.s32.totalorder %s16, 7
      %p160 = por %p158, %p159
      %p161 = scmp.ne.s32.totalorder %s153, %s156
      %p162 = scmp.eq.s32.totalorder %s16, 0
      %p163 = por %p161, %p162
      %p164 = scmp.ne.s32.totalorder %s153, %s156
      %p165 = scmp.eq.s32.totalorder %s21, 7
      %p166 = por %p164, %p165
      %p167 = scmp.ne.s32.totalorder %s156, %s157
      %p168 = scmp.eq.s32.totalorder %s21, 0
      %p169 = por %p167, %p168
      %p170 = scmp.ne.s32.totalorder %s156, %s157
      %p171 = scmp.eq.s32.totalorder %s22, 7
      %p172 = por %p170, %p171
      %p174 = scmp.ne.s32.totalorder %s157, %s173
      %p175 = scmp.eq.s32.totalorder %s22, 0
      %p176 = por %p174, %p175
      %s177 = ssub.s32 %s24, %s38
      %s178 = ssub.s32 %s25, %s34
      %s179 = sor.u32 %s177, %s178
      %p180 = scmp.eq.s32.totalorder %s179, 0
      %s182 = sadd.s32 %s181, 1
      %s183 = scalar_select %p180, %s181, %s182
      %p186 = pneg %p180
      %p187 = scmp.eq.s32.totalorder %s16, 7
      %p188 = por %p186, %p187
      %p189 = scmp.ne.s32.totalorder %s181, %s184
      %p190 = scmp.eq.s32.totalorder %s16, 0
      %p191 = por %p189, %p190
      %p192 = scmp.ne.s32.totalorder %s181, %s184
      %p193 = scmp.eq.s32.totalorder %s21, 7
      %p194 = por %p192, %p193
      %p195 = scmp.ne.s32.totalorder %s184, %s185
      %p196 = scmp.eq.s32.totalorder %s21, 0
      %p197 = por %p195, %p196
      %p198 = scmp.ne.s32.totalorder %s184, %s185
      %p199 = scmp.eq.s32.totalorder %s22, 7
      %p200 = por %p198, %p199
      %p202 = scmp.ne.s32.totalorder %s185, %s201
      %p203 = scmp.eq.s32.totalorder %s22, 0
      %p204 = por %p202, %p203
      %s205 = ssub.s32 %s24, %s38
      %s206 = ssub.s32 %s25, %s34
      %s207 = sor.u32 %s205, %s206
      %p208 = scmp.eq.s32.totalorder %s207, 0
      %s210 = sadd.s32 %s209, 1
      %s211 = scalar_select %p208, %s209, %s210
      %p214 = pneg %p208
      %p215 = scmp.eq.s32.totalorder %s16, 7
      %p216 = por %p214, %p215
      %p217 = scmp.ne.s32.totalorder %s209, %s212
      %p218 = scmp.eq.s32.totalorder %s16, 0
      %p219 = por %p217, %p218
      %p220 = scmp.ne.s32.totalorder %s209, %s212
      %p221 = scmp.eq.s32.totalorder %s21, 7
      %p222 = por %p220, %p221
      %p223 = scmp.ne.s32.totalorder %s212, %s213
      %p224 = scmp.eq.s32.totalorder %s21, 0
      %p225 = por %p223, %p224
      %p226 = scmp.ne.s32.totalorder %s212, %s213
      %p227 = scmp.eq.s32.totalorder %s22, 7
      %p228 = por %p226, %p227
      %p230 = scmp.ne.s32.totalorder %s213, %s229
      %p231 = scmp.eq.s32.totalorder %s22, 0
      %p232 = por %p230, %p231
      %s233 = ssub.s32 %s24, %s38
      %s234 = ssub.s32 %s25, %s34
      %s235 = sor.u32 %s233, %s234
      %p236 = scmp.eq.s32.totalorder %s235, 0
      %s238 = sadd.s32 %s237, 1
      %s239 = scalar_select %p236, %s237, %s238
      %p242 = pneg %p236
      %p243 = scmp.eq.s32.totalorder %s16, 7
      %p244 = por %p242, %p243
      %p245 = scmp.ne.s32.totalorder %s237, %s240
      %p246 = scmp.eq.s32.totalorder %s16, 0
      %p247 = por %p245, %p246
      %p248 = scmp.ne.s32.totalorder %s237, %s240
      %p249 = scmp.eq.s32.totalorder %s21, 7
      %p250 = por %p248, %p249
      %p251 = scmp.ne.s32.totalorder %s240, %s241
      %p252 = scmp.eq.s32.totalorder %s21, 0
      %p253 = por %p251, %p252
      %p254 = scmp.ne.s32.totalorder %s240, %s241
      %p255 = scmp.eq.s32.totalorder %s22, 7
      %p256 = por %p254, %p255
      %p258 = scmp.ne.s32.totalorder %s241, %s257
      %p259 = scmp.eq.s32.totalorder %s22, 0
      %p260 = por %p258, %p259
      %s261 = ssub.s32 %s24, %s38
      %p262 = scmp.eq.s32.totalorder %s261, 0
      %s264 = sadd.s32 %s263, 1
      %s265 = scalar_select %p262, %s263, %s264
      %p268 = pneg %p262
      %p269 = scmp.eq.s32.totalorder %s16, 7
      %p270 = por %p268, %p269
      %p271 = scmp.ne.s32.totalorder %s263, %s266
      %p272 = scmp.eq.s32.totalorder %s16, 0
      %p273 = por %p271, %p272
      %p274 = scmp.ne.s32.totalorder %s263, %s266
      %p275 = scmp.eq.s32.totalorder %s21, 7
      %p276 = por %p274, %p275
      %p277 = scmp.ne.s32.totalorder %s266, %s267
      %p278 = scmp.eq.s32.totalorder %s21, 0
      %p279 = por %p277, %p278
      %p280 = scmp.ne.s32.totalorder %s266, %s267
      %p281 = scmp.eq.s32.totalorder %s22, 7
      %p282 = por %p280, %p281
      %p284 = scmp.ne.s32.totalorder %s267, %s283
      %p285 = scmp.eq.s32.totalorder %s22, 0
      %p286 = por %p284, %p285
      %s287 = ssub.s32 %s23, %s42
      %p288 = scmp.eq.s32.totalorder %s287, 0
      %s290 = sadd.s32 %s289, 1
      %s291 = scalar_select %p288, %s289, %s290
      %p294 = pneg %p288
      %p295 = scmp.eq.s32.totalorder %s16, 7
      %p296 = por %p294, %p295
      %p297 = scmp.ne.s32.totalorder %s289, %s292
      %p298 = scmp.eq.s32.totalorder %s16, 0
      %p299 = por %p297, %p298
      %p300 = scmp.ne.s32.totalorder %s289, %s292
      %p301 = scmp.eq.s32.totalorder %s21, 7
      %p302 = por %p300, %p301
      %p303 = scmp.ne.s32.totalorder %s292, %s293
      %p304 = scmp.eq.s32.totalorder %s21, 0
      %p305 = por %p303, %p304
      %p306 = scmp.ne.s32.totalorder %s292, %s293
      %p307 = scmp.eq.s32.totalorder %s22, 7
      %p308 = por %p306, %p307
      %p310 = scmp.ne.s32.totalorder %s293, %s309
      %p311 = scmp.eq.s32.totalorder %s22, 0
      %p312 = por %p310, %p311
      %p313 = scmp.le.s32.totalorder 1, %s16
      %p314 = scmp.lt.s32.totalorder %s16, 9
      %p315 = pnand %p313, %p314
      %p316 = pneg %p315
      // Predicated region
      $region9: #{moe_forward.3} parent=5 // pred_check
        _
      $region10: #{moe_forward.3} parent=5 // pred_check_branch
        %318 = sbr.rel (%p315) target = $region12
      $region11: #{moe_forward.3} parent=5 // pred_region
        %s319 = ssub.s32 %s16, 1
        // Predicated region
        $region13: #{moe_forward.3} parent=11 // pred_check
          %p320 = pneg %p61
        $region14: #{moe_forward.3} parent=11 // pred_check_branch
          %322 = sbr.rel (%p320) target = $region16
        $region15: #{moe_forward.3} parent=11 // pred_region
          %s323 = smul.u32 2, %s26
          %p324 = scmp.lt.s32.totalorder %s323, 1
          %s325 = scalar_select %p324, %s323, 1
          %s326 = smul.addr %s325, 4
          %s327 = scalar_lea.vmem %s0, %s326
          %s328 = smul.u32 2, %s26
        $region16: #{moe_forward.3} parent=11 // pred_fallthru
          _
        // Predicated region
        $region17: #{moe_forward.3} parent=11 // pred_check
          %p329 = pneg %p87
        $region18: #{moe_forward.3} parent=11 // pred_check_branch
          %331 = sbr.rel (%p329) target = $region20
        $region19: #{moe_forward.3} parent=11 // pred_region
          %s332 = smul.u32 2, %s26
          %p333 = scmp.lt.s32.totalorder %s332, 1
          %s334 = scalar_select %p333, %s332, 1
          %s335 = smul.addr %s334, 8
          %s336 = scalar_lea.vmem %s1, %s335
          %s337 = smul.u32 2, %s26
        $region20: #{moe_forward.3} parent=11 // pred_fallthru
          _
        // Predicated region
        $region21: #{moe_forward.3} parent=11 // pred_check
          %p338 = pneg %p113
        $region22: #{moe_forward.3} parent=11 // pred_check_branch
          %340 = sbr.rel (%p338) target = $region24
        $region23: #{moe_forward.3} parent=11 // pred_region
          %s341 = smul.u32 2, %s26
          %p342 = scmp.lt.s32.totalorder %s341, 1
          %s343 = scalar_select %p342, %s341, 1
          %s344 = smul.addr %s343, 8
          %s345 = scalar_lea.vmem %s2, %s344
          %s346 = smul.u32 2, %s26
        $region24: #{moe_forward.3} parent=11 // pred_fallthru
          _
      $region12: #{moe_forward.3} parent=5 // pred_fallthru
        _
      %p347 = scmp.lt.s32.totalorder %s16, 8
      // Predicated region
      $region25: #{moe_forward.3} parent=5 // pred_check
        %p348 = pneg %p347
      $region26: #{moe_forward.3} parent=5 // pred_check_branch
        %350 = sbr.rel (%p348) target = $region28
      $region27: #{moe_forward.3} parent=5 // pred_region
        // Predicated region
        $region29: #{moe_forward.3} parent=27 // pred_check
          %p351 = pneg %p135
        $region30: #{moe_forward.3} parent=27 // pred_check_branch
          %353 = sbr.rel (%p351) target = $region32
        $region31: #{moe_forward.3} parent=27 // pred_region
          %p354 = scmp.lt.s32.totalorder %s24, 7
          %s355 = scalar_select %p354, %s24, 7
          %p356 = scmp.lt.s32.totalorder %s25, 0
          %s357 = scalar_select %p356, %s25, 0
          %s358 = smul.addr %s355, 4
          %s359 = sadd.s32 %s357, %s358
          %s360 = smul.addr %s359, 4
          %s361 = scalar_lea.vmem %s3, %s360
        $region32: #{moe_forward.3} parent=27 // pred_fallthru
          _
        // Predicated region
        $region33: #{moe_forward.3} parent=27 // pred_check
          %p362 = pneg %p163
        $region34: #{moe_forward.3} parent=27 // pred_check_branch
          %364 = sbr.rel (%p362) target = $region36
        $region35: #{moe_forward.3} parent=27 // pred_region
          %p365 = scmp.lt.s32.totalorder %s24, 7
          %s366 = scalar_select %p365, %s24, 7
          %p367 = scmp.lt.s32.totalorder %s25, 0
          %s368 = scalar_select %p367, %s25, 0
          %s369 = sadd.s32 %s368, %s366
          %s370 = scalar_lea.vmem %s4, %s369
        $region36: #{moe_forward.3} parent=27 // pred_fallthru
          _
        // Predicated region
        $region37: #{moe_forward.3} parent=27 // pred_check
          %p371 = pneg %p191
        $region38: #{moe_forward.3} parent=27 // pred_check_branch
          %373 = sbr.rel (%p371) target = $region40
        $region39: #{moe_forward.3} parent=27 // pred_region
          %p374 = scmp.lt.s32.totalorder %s24, 7
          %s375 = scalar_select %p374, %s24, 7
          %p376 = scmp.lt.s32.totalorder %s25, 0
          %s377 = scalar_select %p376, %s25, 0
          %s378 = smul.addr %s375, 4
          %s379 = sadd.s32 %s377, %s378
          %s380 = smul.addr %s379, 4
          %s381 = scalar_lea.vmem %s5, %s380
        $region40: #{moe_forward.3} parent=27 // pred_fallthru
          _
        // Predicated region
        $region41: #{moe_forward.3} parent=27 // pred_check
          %p382 = pneg %p219
        $region42: #{moe_forward.3} parent=27 // pred_check_branch
          %384 = sbr.rel (%p382) target = $region44
        $region43: #{moe_forward.3} parent=27 // pred_region
          %p385 = scmp.lt.s32.totalorder %s24, 7
          %s386 = scalar_select %p385, %s24, 7
          %p387 = scmp.lt.s32.totalorder %s25, 0
          %s388 = scalar_select %p387, %s25, 0
          %s389 = sadd.s32 %s388, %s386
          %s390 = scalar_lea.vmem %s6, %s389
        $region44: #{moe_forward.3} parent=27 // pred_fallthru
          _
        // Predicated region
        $region45: #{moe_forward.3} parent=27 // pred_check
          %p391 = pneg %p247
        $region46: #{moe_forward.3} parent=27 // pred_check_branch
          %393 = sbr.rel (%p391) target = $region48
        $region47: #{moe_forward.3} parent=27 // pred_region
          %s394 = smul.u32 8, %s25
          %p395 = scmp.lt.s32.totalorder %s24, 7
          %s396 = scalar_select %p395, %s24, 7
          %p397 = scmp.lt.s32.totalorder %s394, 7
          %s398 = scalar_select %p397, %s394, 7
          %s399 = smul.addr %s396, 8
          %s400 = sadd.s32 %s398, %s399
          %s401 = smul.addr %s400, 4
          %s402 = scalar_lea.vmem %s7, %s401
          %s403 = smul.u32 8, %s25
        $region48: #{moe_forward.3} parent=27 // pred_fallthru
          _
        // Predicated region
        $region49: #{moe_forward.3} parent=27 // pred_check
          %p404 = pneg %p273
        $region50: #{moe_forward.3} parent=27 // pred_check_branch
          %406 = sbr.rel (%p404) target = $region52
        $region51: #{moe_forward.3} parent=27 // pred_region
          %p407 = scmp.lt.s32.totalorder %s24, 7
          %s408 = scalar_select %p407, %s24, 7
          %s409 = scalar_lea.vmem %s8, %s408
        $region52: #{moe_forward.3} parent=27 // pred_fallthru
          _
      $region28: #{moe_forward.3} parent=5 // pred_fallthru
        _
      %p410 = scmp.le.s32.totalorder 1, %s16
      %p411 = scmp.lt.s32.totalorder %s16, 9
      %p412 = pnand %p410, %p411
      %p413 = pneg %p412
      // Predicated region
      $region53: #{moe_forward.3} parent=5 // pred_check
        _
      $region54: #{moe_forward.3} parent=5 // pred_check_branch
        %415 = sbr.rel (%p412) target = $region56
      $region55: #{moe_forward.3} parent=5 // pred_region
        %s416 = ssub.s32 %s16, 1
        %s417 = smul.u32 2, %s26
        %p418 = scmp.lt.s32.totalorder %s417, 1
        %s419 = scalar_select %p418, %s417, 1
        %s420 = smul.addr %s419, 4
        %s421 = scalar_lea.vmem %s0, %s420
        %p422 = pneg %p61
        %p423 = pneg %p58
        %s424 = smul.u32 2, %s26
        %p425 = scmp.lt.s32.totalorder %s424, 1
        %s426 = scalar_select %p425, %s424, 1
        %s427 = smul.addr %s426, 8
        %s428 = scalar_lea.vmem %s1, %s427
        %p429 = pneg %p87
        %p430 = pneg %p84
        %s431 = smul.u32 2, %s26
        %p432 = scmp.lt.s32.totalorder %s431, 1
        %s433 = scalar_select %p432, %s431, 1
        %s434 = smul.addr %s433, 8
        %s435 = scalar_lea.vmem %s2, %s434
        %p436 = pneg %p113
        %p437 = pneg %p110
        %p438 = scmp.lt.s32.totalorder %s27, 7
        %s439 = scalar_select %p438, %s27, 7
        %p440 = scmp.lt.s32.totalorder %s28, 0
        %s441 = scalar_select %p440, %s28, 0
        %s442 = smul.addr %s439, 4
        %s443 = sadd.s32 %s441, %s442
        %s444 = smul.addr %s443, 4
        %s445 = scalar_lea.vmem %s3, %s444
        %p446 = pneg %p141
        %p447 = pneg %p138
        %p448 = scmp.lt.s32.totalorder %s27, 7
        %s449 = scalar_select %p448, %s27, 7
        %p450 = scmp.lt.s32.totalorder %s28, 0
        %s451 = scalar_select %p450, %s28, 0
        %s452 = sadd.s32 %s451, %s449
        %s453 = scalar_lea.vmem %s4, %s452
        %p454 = pneg %p169
        %p455 = pneg %p166
        %p456 = scmp.lt.s32.totalorder %s27, 7
        %s457 = scalar_select %p456, %s27, 7
        %p458 = scmp.lt.s32.totalorder %s28, 0
        %s459 = scalar_select %p458, %s28, 0
        %s460 = smul.addr %s457, 4
        %s461 = sadd.s32 %s459, %s460
        %s462 = smul.addr %s461, 4
        %s463 = scalar_lea.vmem %s5, %s462
        %p464 = pneg %p197
        %p465 = pneg %p194
        %p466 = scmp.lt.s32.totalorder %s27, 7
        %s467 = scalar_select %p466, %s27, 7
        %p468 = scmp.lt.s32.totalorder %s28, 0
        %s469 = scalar_select %p468, %s28, 0
        %s470 = sadd.s32 %s469, %s467
        %s471 = scalar_lea.vmem %s6, %s470
        %p472 = pneg %p225
        %p473 = pneg %p222
        %s474 = smul.u32 8, %s28
        %p475 = scmp.lt.s32.totalorder %s27, 7
        %s476 = scalar_select %p475, %s27, 7
        %p477 = scmp.lt.s32.totalorder %s474, 7
        %s478 = scalar_select %p477, %s474, 7
        %s479 = smul.addr %s476, 8
        %s480 = sadd.s32 %s478, %s479
        %s481 = smul.addr %s480, 4
        %s482 = scalar_lea.vmem %s7, %s481
        %p483 = pneg %p253
        %p484 = pneg %p250
        %p485 = scmp.lt.s32.totalorder %s27, 7
        %s486 = scalar_select %p485, %s27, 7
        %s487 = scalar_lea.vmem %s8, %s486
        %p488 = pneg %p279
        %p489 = pneg %p276
        %p490 = pneg %p305
        %p491 = pneg %p302
        %s492 = smul.u32 2, %s26
        %p493 = scmp.lt.s32.totalorder %s492, 1
        %s494 = scalar_select %p493, %s492, 1
        %s495 = smul.addr %s494, 4
        %s496 = scalar_lea.vmem %s0, %s495
        %s497 = smul.u32 2, %s26
        %s498 = smul.u32 2, %s26
        %p499 = scmp.lt.s32.totalorder %s498, 1
        %s500 = scalar_select %p499, %s498, 1
        %s501 = smul.addr %s500, 8
        %s502 = scalar_lea.vmem %s1, %s501
        %s503 = smul.u32 2, %s26
        %s504 = smul.u32 2, %s26
        %p505 = scmp.lt.s32.totalorder %s504, 1
        %s506 = scalar_select %p505, %s504, 1
        %s507 = smul.addr %s506, 8
        %s508 = scalar_lea.vmem %s2, %s507
        %s509 = smul.u32 2, %s26
        %p510 = scmp.lt.s32.totalorder %s27, 7
        %s511 = scalar_select %p510, %s27, 7
        %p512 = scmp.lt.s32.totalorder %s28, 0
        %s513 = scalar_select %p512, %s28, 0
        %s514 = smul.addr %s511, 4
        %s515 = sadd.s32 %s513, %s514
        %s516 = smul.addr %s515, 4
        %s517 = scalar_lea.vmem %s3, %s516
        %p518 = scmp.lt.s32.totalorder %s27, 7
        %s519 = scalar_select %p518, %s27, 7
        %p520 = scmp.lt.s32.totalorder %s28, 0
        %s521 = scalar_select %p520, %s28, 0
        %s522 = sadd.s32 %s521, %s519
        %s523 = scalar_lea.vmem %s4, %s522
        %p524 = scmp.lt.s32.totalorder %s27, 7
        %s525 = scalar_select %p524, %s27, 7
        %p526 = scmp.lt.s32.totalorder %s28, 0
        %s527 = scalar_select %p526, %s28, 0
        %s528 = smul.addr %s525, 4
        %s529 = sadd.s32 %s527, %s528
        %s530 = smul.addr %s529, 4
        %s531 = scalar_lea.vmem %s5, %s530
        %p532 = scmp.lt.s32.totalorder %s27, 7
        %s533 = scalar_select %p532, %s27, 7
        %p534 = scmp.lt.s32.totalorder %s28, 0
        %s535 = scalar_select %p534, %s28, 0
        %s536 = sadd.s32 %s535, %s533
        %s537 = scalar_lea.vmem %s6, %s536
        %s538 = smul.u32 8, %s28
        %p539 = scmp.lt.s32.totalorder %s27, 7
        %s540 = scalar_select %p539, %s27, 7
        %p541 = scmp.lt.s32.totalorder %s538, 7
        %s542 = scalar_select %p541, %s538, 7
        %s543 = smul.addr %s540, 8
        %s544 = sadd.s32 %s542, %s543
        %s545 = smul.addr %s544, 4
        %s546 = scalar_lea.vmem %s7, %s545
        %s547 = smul.u32 8, %s28
        %p548 = scmp.lt.s32.totalorder %s27, 7
        %s549 = scalar_select %p548, %s27, 7
        %s550 = scalar_lea.vmem %s8, %s549
        %s551 = smul.u32 2, %s26
        %p553 = scmp.eq.s32.totalorder %s27, 0
        %p554 = scmp.eq.s32.totalorder %s28, 0
        %p555 = pnand %p553, %p554
        %p556 = pneg %p555
        // Predicated region
        $region57: #{moe_forward.3} parent=55 // pred_check
          _
        $region58: #{moe_forward.3} parent=55 // pred_check_branch
          %558 = sbr.rel (%p555) target = $region60
        $region59: #{moe_forward.3} parent=55 // pred_region
          %vm559 = vcmask 261120
          %560 = vst.msk [vmem:[#allocation2] sm:$0xff] %vm559, 0.0
          %561 = vst.msk [vmem:[#allocation2 + $0x8] sm:$0xff] %vm559, 0.0
        $region60: #{moe_forward.3} parent=55 // pred_fallthru
          _
        %v562 = vld [vmem:[%s508] sm:$0xff]
        %v563 = vld [vmem:[%s508 + $0x8] sm:$0xff]
        %v564 = vstv %s27
        %vm565 = vcmp.eq.s32.totalorder %v562, %v564
        %vm566 = vcmp.eq.s32.totalorder %v563, %v564
        %v567 = vld [vmem:[%s502] sm:$0xff]
        %v568 = vld [vmem:[%s502 + $0x8] sm:$0xff]
        %v569 = vsel %vm565, %v567, 0.0
        %v570 = vsel %vm566, %v568, 0.0
        %vm571 = vcmask 15360
        %v572 = vsel %vm571, %v569, 0.0
        %573 = vadd.xlane.f32.xlu0 %v572
        %v574 = vpop.xlane.xlu0 %573
        %v575 = vsel %vm571, %v570, 0.0
        %576 = vadd.xlane.f32.xlu0 %v575
        %v577 = vpop.xlane.xlu0 %576
        %v578 = vmax.f32 %v574, %v577
        %v579 = vrot.slane %v578, 4
        %v580 = vmax.f32 %v578, %v579
        %v581 = vrot.slane %v580, 2
        %v582 = vmax.f32 %v580, %v581
        %v583 = vrot.slane %v582, 1
        %v584 = vmax.f32 %v582, %v583
        %s585 = vtos %v584
        %p586 = scmp.gt.f32.partialorder %s585, 0.0
        // Predicated region
        $region61: #{moe_forward.3} parent=55 // pred_check
          %p587 = pneg %p586
        $region62: #{moe_forward.3} parent=55 // pred_check_branch
          %589 = sbr.rel (%p587) target = $region64
        $region63: #{moe_forward.3} parent=55 // pred_region
          %v590 = vld [vmem:[%s496] sm:$0xf]
          %v591 = vld [vmem:[%s496 + $0x4] sm:$0xf]
          %v592 = vld [vmem:[%s517] sm:$0xf]
          %v593 = vld [vmem:[%s517 + $0x4] sm:$0xf]
          %v594 = vld [vmem:[%s517 + $0x8] sm:$0xf]
          %v595 = vld [vmem:[%s517 + $0xc] sm:$0xf]
          %v596 = vld [vmem:[%s523] sm:$0x1]
          %v598 = vlaneseq
          %v599 = vshrl.u32 %v598, 7
          %v600 = vsub.s32 0, %v599
          %v601 = vrot.slane %v596, %v600
          %v605 = vunpack.c.l.b16 %v590
          %v606 = vunpack.c.l.b16 %v591
          %v607 = vpack.c.b16 %v606, %v605
          %v612 = vunpack.c.l.b16 %v592
          %v613 = vunpack.c.l.b16 %v593
          %v614 = vunpack.c.l.b16 %v594
          %v615 = vunpack.c.l.b16 %v595
          %v616 = vpack.c.b16 %v613, %v612
          %v617 = vpack.c.b16 %v615, %v614
          %vm620 = vcmask 261120
          %v622 = vsel %vm620, %v607, 0
          %624 = vmatprep.subr.bf16.mxu0 0
          %625 = vmatpush1.bf16.msra.mxu0 0
          %626 = vmatprep.subr.bf16.mxu0 0
          %627 = vmatpush1.bf16.msra.mxu0 0
          %628 = vmatprep.subr.bf16.mxu0 0
          %629 = vmatpush1.bf16.msra.mxu0 0
          %630 = vmatprep.subr.bf16.mxu0 0
          %631 = vmatpush1.bf16.msra.mxu0 0
          %632 = vmatprep.subr.bf16.mxu0 0
          %633 = vmatpush1.bf16.msra.mxu0 0
          %634 = vmatprep.subr.bf16.mxu0 0
          %635 = vmatpush1.bf16.msra.mxu0 0
          %636 = vmatprep.subr.bf16.mxu0 0
          %637 = vmatpush1.bf16.msra.mxu0 %v617
          %638 = vmatprep.subr.bf16.mxu0 0
          %639 = vmatpush1.bf16.msra.mxu0 %v616
          %640 = vmatprep.subr.bf16.mxu0 0
          %641 = vmatpush2.bf16.msra.mxu0 0
          %642 = vmatprep.subr.bf16.mxu0 0
          %643 = vmatpush2.bf16.msra.mxu0 0
          %644 = vmatprep.subr.bf16.mxu0 0
          %645 = vmatpush2.bf16.msra.mxu0 0
          %646 = vmatprep.subr.bf16.mxu0 0
          %647 = vmatpush2.bf16.msra.mxu0 0
          %648 = vmatprep.subr.bf16.mxu0 0
          %649 = vmatpush2.bf16.msra.mxu0 0
          %650 = vmatprep.subr.bf16.mxu0 0
          %651 = vmatpush2.bf16.msra.mxu0 0
          %652 = vmatprep.subr.bf16.mxu0 0
          %653 = vmatpush2.bf16.msra.mxu0 0
          %654 = vmatprep.subr.bf16.mxu0 0
          %655 = vmatpush2.bf16.msra.mxu0 0
          %656 = vmatprep.mubr.bf16.mxu0 0
          %657 = vmatmul.mubr.bf16.gmra.mxu0 %v622
          %v658 = vpop.f32.mrf.mxu0
          %v659 = vadd.f32 %v601, %v658
          %v660 = vpop.f32.mrf.mxu0
          %v661 = vpop.f32.mrf.mxu0
          %v662 = vadd.f32 %v601, %v661
          %v663 = vpop.f32.mrf.mxu0
          %664 = vdwg.mxu0
          %v665 = vld [vmem:[%s531] sm:$0xf]
          %v666 = vld [vmem:[%s531 + $0x4] sm:$0xf]
          %v667 = vld [vmem:[%s531 + $0x8] sm:$0xf]
          %v668 = vld [vmem:[%s531 + $0xc] sm:$0xf]
          %v669 = vld [vmem:[%s537] sm:$0x1]
          %v671 = vlaneseq
          %v672 = vshrl.u32 %v671, 7
          %v673 = vsub.s32 0, %v672
          %v674 = vrot.slane %v669, %v673
          %v680 = vunpack.c.l.b16 %v665
          %v681 = vunpack.c.l.b16 %v666
          %v682 = vunpack.c.l.b16 %v667
          %v683 = vunpack.c.l.b16 %v668
          %v684 = vpack.c.b16 %v681, %v680
          %v685 = vpack.c.b16 %v683, %v682
          %688 = vmatprep.subr.bf16.mxu0 0
          %689 = vmatpush1.bf16.msra.mxu0 0
          %690 = vmatprep.subr.bf16.mxu0 0
          %691 = vmatpush1.bf16.msra.mxu0 0
          %692 = vmatprep.subr.bf16.mxu0 0
          %693 = vmatpush1.bf16.msra.mxu0 0
          %694 = vmatprep.subr.bf16.mxu0 0
          %695 = vmatpush1.bf16.msra.mxu0 0
          %696 = vmatprep.subr.bf16.mxu0 0
          %697 = vmatpush1.bf16.msra.mxu0 0
          %698 = vmatprep.subr.bf16.mxu0 0
          %699 = vmatpush1.bf16.msra.mxu0 0
          %700 = vmatprep.subr.bf16.mxu0 0
          %701 = vmatpush1.bf16.msra.mxu0 %v685
          %702 = vmatprep.subr.bf16.mxu0 0
          %703 = vmatpush1.bf16.msra.mxu0 %v684
          %704 = vmatprep.subr.bf16.mxu0 0
          %705 = vmatpush2.bf16.msra.mxu0 0
          %706 = vmatprep.subr.bf16.mxu0 0
          %707 = vmatpush2.bf16.msra.mxu0 0
          %708 = vmatprep.subr.bf16.mxu0 0
          %709 = vmatpush2.bf16.msra.mxu0 0
          %710 = vmatprep.subr.bf16.mxu0 0
          %711 = vmatpush2.bf16.msra.mxu0 0
          %712 = vmatprep.subr.bf16.mxu0 0
          %713 = vmatpush2.bf16.msra.mxu0 0
          %714 = vmatprep.subr.bf16.mxu0 0
          %715 = vmatpush2.bf16.msra.mxu0 0
          %716 = vmatprep.subr.bf16.mxu0 0
          %717 = vmatpush2.bf16.msra.mxu0 0
          %718 = vmatprep.subr.bf16.mxu0 0
          %719 = vmatpush2.bf16.msra.mxu0 0
          %720 = vmatprep.mubr.bf16.mxu0 0
          %721 = vmatmul.mubr.bf16.gmra.mxu0 %v622
          %v722 = vpop.f32.mrf.mxu0
          %v723 = vadd.f32 %v674, %v722
          %v724 = vpop.f32.mrf.mxu0
          %v725 = vpop.f32.mrf.mxu0
          %v726 = vadd.f32 %v674, %v725
          %v727 = vpop.f32.mrf.mxu0
          %728 = vdwg.mxu0
          %v729 = vsub.f32 0.0, %v659
          %v730 = vsub.f32 0.0, %v662
          %v731 = vmul.f32 %v729, 1.442695
          %v732 = vpow.pop %v731
          %v733 = vmul.f32 %v730, 1.442695
          %v734 = vpow.pop %v733
          %v735 = vadd.f32 %v732, 1.0
          %v736 = vadd.f32 %v734, 1.0
          %v737 = vrcp.pop %v735
          %v738 = vmul.f32 1.0, %v737
          %v739 = vrcp.pop %v736
          %v740 = vmul.f32 1.0, %v739
          %v741 = vmul.f32 %v659, %v738
          %v742 = vmul.f32 %v662, %v740
          %v743 = vmul.f32 %v741, %v723
          %v744 = vmul.f32 %v742, %v726
          %v745 = vpack.c.bf16 %v744, %v743
          %v746 = vld [vmem:[%s546] sm:$0xf]
          %v747 = vld [vmem:[%s546 + $0x4] sm:$0xf]
          %v748 = vld [vmem:[%s546 + $0x8] sm:$0xf]
          %v749 = vld [vmem:[%s546 + $0xc] sm:$0xf]
          %v750 = vld [vmem:[%s546 + $0x10] sm:$0xf]
          %v751 = vld [vmem:[%s546 + $0x14] sm:$0xf]
          %v752 = vld [vmem:[%s546 + $0x18] sm:$0xf]
          %v753 = vld [vmem:[%s546 + $0x1c] sm:$0xf]
          %s754 = scalar_select %p554, 1.0, 0.0
          %v755 = vld [vmem:[%s550] sm:$0x1]
          %v756 = vstv %s754
          %v757 = vmul.f32 %v756, %v755
          %v759 = vlaneseq
          %v760 = vshrl.u32 %v759, 7
          %v761 = vsub.s32 0, %v760
          %v762 = vrot.slane %v757, %v761
          %v772 = vunpack.c.l.b16 %v746
          %v773 = vunpack.c.l.b16 %v747
          %v774 = vunpack.c.l.b16 %v748
          %v775 = vunpack.c.l.b16 %v749
          %v776 = vunpack.c.l.b16 %v750
          %v777 = vunpack.c.l.b16 %v751
          %v778 = vunpack.c.l.b16 %v752
          %v779 = vunpack.c.l.b16 %v753
          %v780 = vpack.c.b16 %v773, %v772
          %v781 = vpack.c.b16 %v775, %v774
          %v782 = vpack.c.b16 %v777, %v776
          %v783 = vpack.c.b16 %v779, %v778
          %vm788 = vcmask 523264
          %v790 = vsel %vm788, %v745, 0
          %792 = vmatprep.subr.bf16.mxu0 0
          %793 = vmatpush1.bf16.msra.mxu0 0
          %794 = vmatprep.subr.bf16.mxu0 0
          %795 = vmatpush1.bf16.msra.mxu0 0
          %796 = vmatprep.subr.bf16.mxu0 0
          %797 = vmatpush1.bf16.msra.mxu0 0
          %798 = vmatprep.subr.bf16.mxu0 0
          %799 = vmatpush1.bf16.msra.mxu0 0
          %800 = vmatprep.subr.bf16.mxu0 0
          %801 = vmatpush1.bf16.msra.mxu0 %v783
          %802 = vmatprep.subr.bf16.mxu0 0
          %803 = vmatpush1.bf16.msra.mxu0 %v782
          %804 = vmatprep.subr.bf16.mxu0 0
          %805 = vmatpush1.bf16.msra.mxu0 %v781
          %806 = vmatprep.subr.bf16.mxu0 0
          %807 = vmatpush1.bf16.msra.mxu0 %v780
          %808 = vmatprep.subr.bf16.mxu0 0
          %809 = vmatpush2.bf16.msra.mxu0 0
          %810 = vmatprep.subr.bf16.mxu0 0
          %811 = vmatpush2.bf16.msra.mxu0 0
          %812 = vmatprep.subr.bf16.mxu0 0
          %813 = vmatpush2.bf16.msra.mxu0 0
          %814 = vmatprep.subr.bf16.mxu0 0
          %815 = vmatpush2.bf16.msra.mxu0 0
          %816 = vmatprep.subr.bf16.mxu0 0
          %817 = vmatpush2.bf16.msra.mxu0 0
          %818 = vmatprep.subr.bf16.mxu0 0
          %819 = vmatpush2.bf16.msra.mxu0 0
          %820 = vmatprep.subr.bf16.mxu0 0
          %821 = vmatpush2.bf16.msra.mxu0 0
          %822 = vmatprep.subr.bf16.mxu0 0
          %823 = vmatpush2.bf16.msra.mxu0 0
          %824 = vmatprep.mubr.bf16.mxu0 0
          %825 = vmatmul.mubr.bf16.gmra.mxu0 %v790
          %v826 = vpop.f32.mrf.mxu0
          %v827 = vadd.f32 %v762, %v826
          %v828 = vpop.f32.mrf.mxu0
          %v829 = vpop.f32.mrf.mxu0
          %v830 = vadd.f32 %v762, %v829
          %v831 = vpop.f32.mrf.mxu0
          %832 = vdwg.mxu0
          %v833 = vld [vmem:[#allocation2] sm:$0xff]
          %v834 = vld [vmem:[#allocation2 + $0x8] sm:$0xff]
          %v835 = vmul.f32 %v574, %v827
          %v836 = vmul.f32 %v577, %v830
          %v837 = vadd.f32 %v833, %v835
          %v838 = vadd.f32 %v834, %v836
          %839 = vst.msk [vmem:[#allocation2] sm:$0xff] %vm620, %v837
          %840 = vst.msk [vmem:[#allocation2 + $0x8] sm:$0xff] %vm620, %v838
        $region64: #{moe_forward.3} parent=55 // pred_fallthru
          _
        %p841 = scmp.eq.s32.totalorder %s27, 7
        %p842 = pnand %p841, %p554
        %p843 = pneg %p842
        // Predicated region
        $region65: #{moe_forward.3} parent=55 // pred_check
          _
        $region66: #{moe_forward.3} parent=55 // pred_check_branch
          %845 = sbr.rel (%p842) target = $region68
        $region67: #{moe_forward.3} parent=55 // pred_region
          %v846 = vld [vmem:[#allocation2] sm:$0xff]
          %v847 = vld [vmem:[#allocation2 + $0x8] sm:$0xff]
          %vm848 = vcmask 261120
          %849 = vst.msk [vmem:[#allocation3] sm:$0xff] %vm848, %v846
          %850 = vst.msk [vmem:[#allocation3 + $0x8] sm:$0xff] %vm848, %v847
        $region68: #{moe_forward.3} parent=55 // pred_fallthru
          _
        // Predicated region
        $region69: #{moe_forward.3} parent=55 // pred_check
          %p851 = pneg %p302
        $region70: #{moe_forward.3} parent=55 // pred_check_branch
          %853 = sbr.rel (%p851) target = $region72
        $region71: #{moe_forward.3} parent=55 // pred_region
          %s854 = smul.u32 2, %s26
          %s856 = ssub.s32 256, 256
          %857 = vsyncadd [#allocation4], %s856
          %s858 = smul.addr %s854, 128
          %s859 = scalar_lea.hbm %s9, %s858
          %s860 = sshll.u32 [#allocation3], 4
          %s861 = int_to_ptr.vmem [resolvable:$true] %s860
          %866 = dma.vmem_to_hbm [thread:$0]  %s861, 256, %s859, [#allocation4], 128, 128, 8
        $region72: #{moe_forward.3} parent=55 // pred_fallthru
          _
        // Predicated region
        $region73: #{moe_forward.3} parent=55 // pred_check
          %p867 = pneg %p302
        $region74: #{moe_forward.3} parent=55 // pred_check_branch
          %869 = sbr.rel (%p867) target = $region76
        $region75: #{moe_forward.3} parent=55 // pred_region
          %870 = dma.done [#allocation4], 256
        $region76: #{moe_forward.3} parent=55 // pred_fallthru
          _
      $region56: #{moe_forward.3} parent=5 // pred_fallthru
        _
      %p871 = scmp.le.s32.totalorder 2, %s16
      // Predicated region
      $region77: #{moe_forward.3} parent=5 // pred_check
        %p872 = pneg %p871
      $region78: #{moe_forward.3} parent=5 // pred_check_branch
        %874 = sbr.rel (%p872) target = $region80
      $region79: #{moe_forward.3} parent=5 // pred_region
        %s875 = ssub.s32 %s16, 2
      $region80: #{moe_forward.3} parent=5 // pred_fallthru
        _
    $region6: #{moe_forward.3} parent=1 // loop_footer
      %s20 = sadd.s32 1, %s16
    $region7: #{moe_forward.3} parent=1 // loop_footer_branch
      %15 = sbr.rel target = $region3
    $region8: #{moe_forward.3} parent=1 // loop_exit
      _
    %876 = vsyncpa [#allocation4], 1
    %s877 = scalar_lea.sflag [#allocation4], 1
    %878 = vsyncpa %s877, 1

</llo_original>
